<compile_context>
chip_gen: v7x
topology: tpu7x:2x2x1
jax: 0.10.0
libtpu: 0.0.40
codegen_flags: <defaults>
</compile_context>

<pallas_src>
import functools

import jax
import jax.numpy as jnp
from jax.experimental import pallas as pl
from jax.experimental.pallas import tpu as pltpu


IN_FEATURES = 28 * 28     # 784 -- kept un-padded (full-array last-dim block)
HIDDEN = 512
OUT_FEATURES = 10
OUT_PADDED = 128          # lane-dense final store; sliced back to 10 outside
LN_EPS = 1e-5
MAX_TILE = 1024           # batch-tile cap: f32 LN temporaries stay in VMEM
_VMEM_LIMIT = 48 * 1024 * 1024   # < v7x 64 MiB physical, plenty on v5e/v6e


def _round_up(x, m):
    return (x + m - 1) // m * m


# ---------------------------------------------------------------------------
# Fused Pallas kernel (whole MLP per batch tile)
# ---------------------------------------------------------------------------

def _make_fused_kernel(n_hidden):
    """Kernel args: x_ref, (w,b,gamma,beta) x n_hidden, w_out, b_out, o_ref."""

    def kernel(*refs):
        x_ref = refs[0]
        o_ref = refs[-1]
        p = refs[1:-1]

        # bf16 cast happens here, so no padded/cast activation copy hits HBM.
        h = x_ref[...].astype(jnp.bfloat16)                  # (TB, 784)

        k = 0
        for _ in range(n_hidden):
            w_ref, b_ref, g_ref, beta_ref = p[k:k + 4]
            k += 4
            # MXU: bf16 x bf16 -> f32 accumulate.
            y = jnp.dot(h, w_ref[...], preferred_element_type=jnp.float32)
            y = y + b_ref[...]                # implicit (1,D)+(TB,D) broadcast
            # Single-pass LayerNorm stats: both lane-reduces depend only on y
            # (no centered full-tile temporary between them).
            inv_d = 1.0 / float(y.shape[-1])
            mean = jnp.sum(y, axis=-1, keepdims=True) * inv_d
            msq = jnp.sum(y * y, axis=-1, keepdims=True) * inv_d
            rstd = jax.lax.rsqrt(msq - mean * mean + LN_EPS)
            y = (y - mean) * rstd * g_ref[...] + beta_ref[...]
            # ReLU; Dropout(p=0) is identity.  Re-narrow for the next matmul.
            h = jnp.maximum(y, 0.0).astype(jnp.bfloat16)

        w_ref, b_ref = p[k], p[k + 1]
        out = jnp.dot(h, w_ref[...], preferred_element_type=jnp.float32)
        o_ref[...] = (out + b_ref[...]).astype(o_ref.dtype)  # bf16 store

    return kernel


def _fused_mlp_call(x_f32, flat_params, n_hidden, tb):
    b_pad = x_f32.shape[0]
    grid = (pl.cdiv(b_pad, tb),)

    in_specs = [pl.BlockSpec((tb, IN_FEATURES), lambda i: (i, 0))]
    for arr in flat_params:
        # Whole-array, grid-invariant blocks -> VMEM-resident weights/params.
        # TODO(synk): pl.Buffered(1) single-buffering for these constant-index
        # params would save ~1.5 MiB VMEM; left at the default (negligible).
        in_specs.append(pl.BlockSpec(arr.shape, lambda i: (0, 0)))
    out_spec = pl.BlockSpec((tb, OUT_PADDED), lambda i: (i, 0))

    params_bytes = int(sum(a.size * a.dtype.itemsize for a in flat_params))
    flops = 2 * b_pad * (IN_FEATURES * HIDDEN
                         + (n_hidden - 1) * HIDDEN * HIDDEN
                         + HIDDEN * OUT_PADDED)
    cost = pl.CostEstimate(
        flops=int(flops),
        transcendentals=int(n_hidden * b_pad),          # one rsqrt / row / layer
        bytes_accessed=int(b_pad * IN_FEATURES * 4      # f32 activations in
                           + params_bytes               # resident params
                           + b_pad * OUT_PADDED * 2),   # bf16 logits out
    )

    return pl.pallas_call(
        _make_fused_kernel(n_hidden),
        out_shape=jax.ShapeDtypeStruct((b_pad, OUT_PADDED), jnp.bfloat16),
        grid=grid,
        in_specs=in_specs,
        out_specs=out_spec,
        compiler_params=pltpu.CompilerParams(
            dimension_semantics=("parallel",),
            vmem_limit_bytes=_VMEM_LIMIT),
        cost_estimate=cost,
    )(x_f32, *flat_params)


# ---------------------------------------------------------------------------
# Parameters (PyTorch-like init), preprocessing, forward
# ---------------------------------------------------------------------------

def init_params(key, hidden_layers=2):
    """Returns a dict of raw f32 parameters (arrays only — jit friendly)."""
    dims = [IN_FEATURES] + [HIDDEN] * hidden_layers + [OUT_FEATURES]
    params = {}
    for i in range(len(dims) - 1):
        din, dout = dims[i], dims[i + 1]
        key, kw, kb = jax.random.split(key, 3)
        bound = 1.0 / (din ** 0.5)
        params[f"w{i}"] = jax.random.uniform(kw, (din, dout), jnp.float32,
                                             -bound, bound)
        params[f"b{i}"] = jax.random.uniform(kb, (1, dout), jnp.float32,
                                             -bound, bound)
        if i < len(dims) - 2:
            params[f"g{i}"] = jnp.ones((1, dout), jnp.float32)
            params[f"beta{i}"] = jnp.zeros((1, dout), jnp.float32)
    return params


def prepare_params(params, hidden_layers=2):
    """One-time bf16 cast (and lane-pad of the final layer) for the kernel."""
    flat = []
    for i in range(hidden_layers):
        flat.append(params[f"w{i}"].astype(jnp.bfloat16))   # w0 stays K=784
        flat.append(params[f"b{i}"])                        # f32 (1, 512)
        flat.append(params[f"g{i}"])                        # f32 (1, 512)
        flat.append(params[f"beta{i}"])                     # f32 (1, 512)
    w_out = jnp.pad(params[f"w{hidden_layers}"],
                    ((0, 0), (0, OUT_PADDED - OUT_FEATURES)))
    b_out = jnp.pad(params[f"b{hidden_layers}"],
                    ((0, 0), (0, OUT_PADDED - OUT_FEATURES)))
    flat.append(w_out.astype(jnp.bfloat16))                 # (512, 128) bf16
    flat.append(b_out)                                       # (1, 128) f32
    return tuple(flat)


@functools.partial(jax.jit, static_argnames=("hidden_layers",))
def ln_fmnist_mlp_forward(x_nchw, flat_params, hidden_layers=2):
    """x_nchw: (B, 1, 28, 28) -> logits (B, 10)."""
    B = x_nchw.shape[0]
    # Raw (B, 784) f32 goes straight to the kernel — no pad-to-896 / bf16 pass.
    x = x_nchw.reshape(B, IN_FEATURES).astype(jnp.float32)

    # Sublane-align the batch only (cheap, usually a no-op for real batches).
    b_pad = _round_up(max(B, 8), 8)
    if b_pad != B:
        x = jnp.pad(x, ((0, b_pad - B), (0, 0)))

    # Batch tile: aim for >= 2 tiles (keeps both v7x TensorCores busy), cap at
    # MAX_TILE so f32 LN temporaries stay well inside the scoped VMEM limit.
    # A ragged last block is fine: rows are independent and OOB rows are
    # garbage on read / dropped on write, then sliced off below.
    tb = max(8, min(MAX_TILE, _round_up(pl.cdiv(b_pad, 2), 8)))

    out = _fused_mlp_call(x, flat_params, hidden_layers, tb)  # (b_pad,128) bf16
    return out[:B, :OUT_FEATURES].astype(jnp.float32)         # (B, 10) f32


# ---------------------------------------------------------------------------
# Pure-JAX reference (mirrors the kernel's bf16 matmul operands / bf16 output)
# ---------------------------------------------------------------------------

def reference_forward(x_nchw, params, hidden_layers=2):
    B = x_nchw.shape[0]
    h = x_nchw.reshape(B, -1).astype(jnp.float32)
    for i in range(hidden_layers):
        w, b = params[f"w{i}"], params[f"b{i}"]
        g, beta = params[f"g{i}"], params[f"beta{i}"]
        y = jnp.dot(h.astype(jnp.bfloat16), w.astype(jnp.bfloat16),
                    preferred_element_type=jnp.float32) + b
        mean = jnp.mean(y, axis=-1, keepdims=True)
        var = jnp.mean((y - mean) ** 2, axis=-1, keepdims=True)
        y = (y - mean) * jax.lax.rsqrt(var + LN_EPS) * g + beta
        h = jnp.maximum(y, 0.0)
    w, b = params[f"w{hidden_layers}"], params[f"b{hidden_layers}"]
    out = jnp.dot(h.astype(jnp.bfloat16), w.astype(jnp.bfloat16),
                  preferred_element_type=jnp.float32) + b
    return out.astype(jnp.bfloat16).astype(jnp.float32)   # mirror bf16 store


if __name__ == "__main__":
    key = jax.random.PRNGKey(0)
    kparams, kx = jax.random.split(key)

    hidden_layers = 2
    raw_params = init_params(kparams, hidden_layers=hidden_layers)
    flat_params = prepare_params(raw_params, hidden_layers=hidden_layers)

    # Small deterministic input consistent with the module: (B, 1, 28, 28)
    B = 2
    x = jax.random.normal(kx, (B, 1, 28, 28), jnp.float32)

    logits = ln_fmnist_mlp_forward(x, flat_params, hidden_layers=hidden_layers)
    logits = jax.block_until_ready(logits)

    ref = reference_forward(x, raw_params, hidden_layers=hidden_layers)
    assert logits.shape == (B, OUT_FEATURES)
    assert jnp.allclose(logits, ref, atol=1e-2, rtol=1e-2), (
        "mismatch vs reference: max |diff| = "
        f"{float(jnp.max(jnp.abs(logits - ref)))}")

    print("KERNEL_OK")
</pallas_src>

<mosaic_0001>
module attributes {stable_mosaic.version = 11 : i64} {
  func.func @kernel(%arg0: i32, %arg1: memref<8x784xf32, #tpu.memory_space<vmem>>, %arg2: memref<784x512xbf16, #tpu.memory_space<vmem>>, %arg3: memref<1x512xf32, #tpu.memory_space<vmem>>, %arg4: memref<1x512xf32, #tpu.memory_space<vmem>>, %arg5: memref<1x512xf32, #tpu.memory_space<vmem>>, %arg6: memref<512x512xbf16, #tpu.memory_space<vmem>>, %arg7: memref<1x512xf32, #tpu.memory_space<vmem>>, %arg8: memref<1x512xf32, #tpu.memory_space<vmem>>, %arg9: memref<1x512xf32, #tpu.memory_space<vmem>>, %arg10: memref<512x128xbf16, #tpu.memory_space<vmem>>, %arg11: memref<1x128xf32, #tpu.memory_space<vmem>>, %arg12: memref<8x128xbf16, #tpu.memory_space<vmem>>) attributes {dimension_semantics = [#tpu.dimension_semantics<parallel>], iteration_bounds = array<i64: 1>, scalar_prefetch = 0 : i64, scratch_operands = 0 : i64, tpu.core_type = #tpu.core_type<tc>, window_params = [{transform_indices = @transform_0, window_bounds = array<i64: 8, 784>}, {pipeline_mode = #tpu.pipeline_mode<synchronous>, transform_indices = @transform_1, window_bounds = array<i64: 784, 512>}, {pipeline_mode = #tpu.pipeline_mode<synchronous>, transform_indices = @transform_2, window_bounds = array<i64: 1, 512>}, {pipeline_mode = #tpu.pipeline_mode<synchronous>, transform_indices = @transform_3, window_bounds = array<i64: 1, 512>}, {pipeline_mode = #tpu.pipeline_mode<synchronous>, transform_indices = @transform_4, window_bounds = array<i64: 1, 512>}, {pipeline_mode = #tpu.pipeline_mode<synchronous>, transform_indices = @transform_5, window_bounds = array<i64: 512, 512>}, {pipeline_mode = #tpu.pipeline_mode<synchronous>, transform_indices = @transform_6, window_bounds = array<i64: 1, 512>}, {pipeline_mode = #tpu.pipeline_mode<synchronous>, transform_indices = @transform_7, window_bounds = array<i64: 1, 512>}, {pipeline_mode = #tpu.pipeline_mode<synchronous>, transform_indices = @transform_8, window_bounds = array<i64: 1, 512>}, {pipeline_mode = #tpu.pipeline_mode<synchronous>, transform_indices = @transform_9, window_bounds = array<i64: 512, 128>}, {pipeline_mode = #tpu.pipeline_mode<synchronous>, transform_indices = @transform_10, window_bounds = array<i64: 1, 128>}, {transform_indices = @transform_11, window_bounds = array<i64: 8, 128>}]} {
    %c0 = arith.constant 0 : index
    %c0_0 = arith.constant 0 : index
    %0 = vector.load %arg1[%c0, %c0_0] : memref<8x784xf32, #tpu.memory_space<vmem>>, vector<8x784xf32>
    %1 = arith.truncf %0 : vector<8x784xf32> to vector<8x784xbf16>
    %c0_1 = arith.constant 0 : index
    %c0_2 = arith.constant 0 : index
    %2 = vector.load %arg2[%c0_1, %c0_2] : memref<784x512xbf16, #tpu.memory_space<vmem>>, vector<784x512xbf16>
    %cst = arith.constant dense<0.000000e+00> : vector<8x512xf32>
    %3 = tpu.matmul %1, %2, %cst {dimension_numbers = #tpu.dot_dimension_numbers<[1], [0], [0], [1], [0, 0, 1, 1], [], []>} : vector<8x784xbf16>, vector<784x512xbf16>, vector<8x512xf32> -> vector<8x512xf32>
    %c0_3 = arith.constant 0 : index
    %c0_4 = arith.constant 0 : index
    %4 = vector.load %arg3[%c0_3, %c0_4] : memref<1x512xf32, #tpu.memory_space<vmem>>, vector<1x512xf32>
    %5 = vector.broadcast %4 : vector<1x512xf32> to vector<8x512xf32>
    %6 = arith.addf %3, %5 : vector<8x512xf32>
    %cst_5 = arith.constant dense<0.000000e+00> : vector<8xf32>
    %7 = vector.multi_reduction <add>, %6, %cst_5 [1] : vector<8x512xf32> to vector<8xf32>
    %8 = vector.shape_cast %7 : vector<8xf32> to vector<8x1xf32>
    %cst_6 = arith.constant 0.001953125 : f32
    %9 = vector.broadcast %cst_6 : f32 to vector<8x1xf32>
    %10 = arith.mulf %8, %9 : vector<8x1xf32>
    %11 = arith.mulf %6, %6 : vector<8x512xf32>
    %cst_7 = arith.constant dense<0.000000e+00> : vector<8xf32>
    %12 = vector.multi_reduction <add>, %11, %cst_7 [1] : vector<8x512xf32> to vector<8xf32>
    %13 = vector.shape_cast %12 : vector<8xf32> to vector<8x1xf32>
    %cst_8 = arith.constant 0.001953125 : f32
    %14 = vector.broadcast %cst_8 : f32 to vector<8x1xf32>
    %15 = arith.mulf %13, %14 : vector<8x1xf32>
    %16 = arith.mulf %10, %10 : vector<8x1xf32>
    %17 = arith.subf %15, %16 : vector<8x1xf32>
    %cst_9 = arith.constant 9.99999974E-6 : f32
    %18 = vector.broadcast %cst_9 : f32 to vector<8x1xf32>
    %19 = arith.addf %17, %18 : vector<8x1xf32>
    %20 = math.rsqrt %19 : vector<8x1xf32>
    %21 = vector.broadcast %10 : vector<8x1xf32> to vector<8x512xf32>
    %22 = arith.subf %6, %21 : vector<8x512xf32>
    %23 = vector.broadcast %20 : vector<8x1xf32> to vector<8x512xf32>
    %24 = arith.mulf %22, %23 : vector<8x512xf32>
    %c0_10 = arith.constant 0 : index
    %c0_11 = arith.constant 0 : index
    %25 = vector.load %arg4[%c0_10, %c0_11] : memref<1x512xf32, #tpu.memory_space<vmem>>, vector<1x512xf32>
    %26 = vector.broadcast %25 : vector<1x512xf32> to vector<8x512xf32>
    %27 = arith.mulf %24, %26 : vector<8x512xf32>
    %c0_12 = arith.constant 0 : index
    %c0_13 = arith.constant 0 : index
    %28 = vector.load %arg5[%c0_12, %c0_13] : memref<1x512xf32, #tpu.memory_space<vmem>>, vector<1x512xf32>
    %29 = vector.broadcast %28 : vector<1x512xf32> to vector<8x512xf32>
    %30 = arith.addf %27, %29 : vector<8x512xf32>
    %cst_14 = arith.constant 0.000000e+00 : f32
    %31 = vector.broadcast %cst_14 : f32 to vector<8x512xf32>
    %32 = arith.maximumf %30, %31 : vector<8x512xf32>
    %33 = arith.truncf %32 : vector<8x512xf32> to vector<8x512xbf16>
    %c0_15 = arith.constant 0 : index
    %c0_16 = arith.constant 0 : index
    %34 = vector.load %arg6[%c0_15, %c0_16] : memref<512x512xbf16, #tpu.memory_space<vmem>>, vector<512x512xbf16>
    %cst_17 = arith.constant dense<0.000000e+00> : vector<8x512xf32>
    %35 = tpu.matmul %33, %34, %cst_17 {dimension_numbers = #tpu.dot_dimension_numbers<[1], [0], [0], [1], [0, 0, 1, 1], [], []>} : vector<8x512xbf16>, vector<512x512xbf16>, vector<8x512xf32> -> vector<8x512xf32>
    %c0_18 = arith.constant 0 : index
    %c0_19 = arith.constant 0 : index
    %36 = vector.load %arg7[%c0_18, %c0_19] : memref<1x512xf32, #tpu.memory_space<vmem>>, vector<1x512xf32>
    %37 = vector.broadcast %36 : vector<1x512xf32> to vector<8x512xf32>
    %38 = arith.addf %35, %37 : vector<8x512xf32>
    %cst_20 = arith.constant dense<0.000000e+00> : vector<8xf32>
    %39 = vector.multi_reduction <add>, %38, %cst_20 [1] : vector<8x512xf32> to vector<8xf32>
    %40 = vector.shape_cast %39 : vector<8xf32> to vector<8x1xf32>
    %cst_21 = arith.constant 0.001953125 : f32
    %41 = vector.broadcast %cst_21 : f32 to vector<8x1xf32>
    %42 = arith.mulf %40, %41 : vector<8x1xf32>
    %43 = arith.mulf %38, %38 : vector<8x512xf32>
    %cst_22 = arith.constant dense<0.000000e+00> : vector<8xf32>
    %44 = vector.multi_reduction <add>, %43, %cst_22 [1] : vector<8x512xf32> to vector<8xf32>
    %45 = vector.shape_cast %44 : vector<8xf32> to vector<8x1xf32>
    %cst_23 = arith.constant 0.001953125 : f32
    %46 = vector.broadcast %cst_23 : f32 to vector<8x1xf32>
    %47 = arith.mulf %45, %46 : vector<8x1xf32>
    %48 = arith.mulf %42, %42 : vector<8x1xf32>
    %49 = arith.subf %47, %48 : vector<8x1xf32>
    %cst_24 = arith.constant 9.99999974E-6 : f32
    %50 = vector.broadcast %cst_24 : f32 to vector<8x1xf32>
    %51 = arith.addf %49, %50 : vector<8x1xf32>
    %52 = math.rsqrt %51 : vector<8x1xf32>
    %53 = vector.broadcast %42 : vector<8x1xf32> to vector<8x512xf32>
    %54 = arith.subf %38, %53 : vector<8x512xf32>
    %55 = vector.broadcast %52 : vector<8x1xf32> to vector<8x512xf32>
    %56 = arith.mulf %54, %55 : vector<8x512xf32>
    %c0_25 = arith.constant 0 : index
    %c0_26 = arith.constant 0 : index
    %57 = vector.load %arg8[%c0_25, %c0_26] : memref<1x512xf32, #tpu.memory_space<vmem>>, vector<1x512xf32>
    %58 = vector.broadcast %57 : vector<1x512xf32> to vector<8x512xf32>
    %59 = arith.mulf %56, %58 : vector<8x512xf32>
    %c0_27 = arith.constant 0 : index
    %c0_28 = arith.constant 0 : index
    %60 = vector.load %arg9[%c0_27, %c0_28] : memref<1x512xf32, #tpu.memory_space<vmem>>, vector<1x512xf32>
    %61 = vector.broadcast %60 : vector<1x512xf32> to vector<8x512xf32>
    %62 = arith.addf %59, %61 : vector<8x512xf32>
    %cst_29 = arith.constant 0.000000e+00 : f32
    %63 = vector.broadcast %cst_29 : f32 to vector<8x512xf32>
    %64 = arith.maximumf %62, %63 : vector<8x512xf32>
    %65 = arith.truncf %64 : vector<8x512xf32> to vector<8x512xbf16>
    %c0_30 = arith.constant 0 : index
    %c0_31 = arith.constant 0 : index
    %66 = vector.load %arg10[%c0_30, %c0_31] : memref<512x128xbf16, #tpu.memory_space<vmem>>, vector<512x128xbf16>
    %cst_32 = arith.constant dense<0.000000e+00> : vector<8x128xf32>
    %67 = tpu.matmul %65, %66, %cst_32 {dimension_numbers = #tpu.dot_dimension_numbers<[1], [0], [0], [1], [0, 0, 1, 1], [], []>} : vector<8x512xbf16>, vector<512x128xbf16>, vector<8x128xf32> -> vector<8x128xf32>
    %c0_33 = arith.constant 0 : index
    %c0_34 = arith.constant 0 : index
    %68 = vector.load %arg11[%c0_33, %c0_34] : memref<1x128xf32, #tpu.memory_space<vmem>>, vector<1x128xf32>
    %69 = vector.broadcast %68 : vector<1x128xf32> to vector<8x128xf32>
    %70 = arith.addf %67, %69 : vector<8x128xf32>
    %71 = arith.truncf %70 : vector<8x128xf32> to vector<8x128xbf16>
    %c0_35 = arith.constant 0 : index
    %c0_36 = arith.constant 0 : index
    %72 = vector.load %arg12[%c0_35, %c0_36] : memref<8x128xbf16, #tpu.memory_space<vmem>>, vector<8x128xbf16>
    tpu.vector_store %arg12[%c0_35, %c0_36], %71 {strides = array<i32>} : memref<8x128xbf16, #tpu.memory_space<vmem>>, vector<8x128xbf16>,
    return
  }
  func.func @transform_0(%arg0: i32) -> (i32, i32) {
    %c0_i32 = arith.constant 0 : i32
    %c0_i32_0 = arith.constant 0 : i32
    return %arg0, %c0_i32 : i32, i32
  }
  func.func @transform_1(%arg0: i32) -> (i32, i32) {
    %c0_i32 = arith.constant 0 : i32
    %c0_i32_0 = arith.constant 0 : i32
    %c0_i32_1 = arith.constant 0 : i32
    return %c0_i32, %c0_i32_0 : i32, i32
  }
  func.func @transform_2(%arg0: i32) -> (i32, i32) {
    %c0_i32 = arith.constant 0 : i32
    %c0_i32_0 = arith.constant 0 : i32
    %c0_i32_1 = arith.constant 0 : i32
    return %c0_i32, %c0_i32_0 : i32, i32
  }
  func.func @transform_3(%arg0: i32) -> (i32, i32) {
    %c0_i32 = arith.constant 0 : i32
    %c0_i32_0 = arith.constant 0 : i32
    %c0_i32_1 = arith.constant 0 : i32
    return %c0_i32, %c0_i32_0 : i32, i32
  }
  func.func @transform_4(%arg0: i32) -> (i32, i32) {
    %c0_i32 = arith.constant 0 : i32
    %c0_i32_0 = arith.constant 0 : i32
    %c0_i32_1 = arith.constant 0 : i32
    return %c0_i32, %c0_i32_0 : i32, i32
  }
  func.func @transform_5(%arg0: i32) -> (i32, i32) {
    %c0_i32 = arith.constant 0 : i32
    %c0_i32_0 = arith.constant 0 : i32
    %c0_i32_1 = arith.constant 0 : i32
    return %c0_i32, %c0_i32_0 : i32, i32
  }
  func.func @transform_6(%arg0: i32) -> (i32, i32) {
    %c0_i32 = arith.constant 0 : i32
    %c0_i32_0 = arith.constant 0 : i32
    %c0_i32_1 = arith.constant 0 : i32
    return %c0_i32, %c0_i32_0 : i32, i32
  }
  func.func @transform_7(%arg0: i32) -> (i32, i32) {
    %c0_i32 = arith.constant 0 : i32
    %c0_i32_0 = arith.constant 0 : i32
    %c0_i32_1 = arith.constant 0 : i32
    return %c0_i32, %c0_i32_0 : i32, i32
  }
  func.func @transform_8(%arg0: i32) -> (i32, i32) {
    %c0_i32 = arith.constant 0 : i32
    %c0_i32_0 = arith.constant 0 : i32
    %c0_i32_1 = arith.constant 0 : i32
    return %c0_i32, %c0_i32_0 : i32, i32
  }
  func.func @transform_9(%arg0: i32) -> (i32, i32) {
    %c0_i32 = arith.constant 0 : i32
    %c0_i32_0 = arith.constant 0 : i32
    %c0_i32_1 = arith.constant 0 : i32
    return %c0_i32, %c0_i32_0 : i32, i32
  }
  func.func @transform_10(%arg0: i32) -> (i32, i32) {
    %c0_i32 = arith.constant 0 : i32
    %c0_i32_0 = arith.constant 0 : i32
    %c0_i32_1 = arith.constant 0 : i32
    return %c0_i32, %c0_i32_0 : i32, i32
  }
  func.func @transform_11(%arg0: i32) -> (i32, i32) {
    %c0_i32 = arith.constant 0 : i32
    %c0_i32_0 = arith.constant 0 : i32
    return %arg0, %c0_i32 : i32, i32
  }
}

</mosaic_0001>

<llo_original>
// kernel: ln_fmnist_mlp_forward.1
$region0: #{ln_fmnist_mlp_forward.1}
  #allocation0 [shape = 'u32[]', space=smem, size = 0x4, offset = 0x4, fixed_abs, tag = 'smem constant byte address 0x4 - core index']
  #allocation1 [shape = 'u32[144,128]{1,0:T(1,128)}', space=vmem, size = 0x12000, scoped, tag = 'internal scratch']
  %s0 = inlined_call_operand.vmem [shape: f32[8,784], index: 0, kind: input, shape index: {}]
  %s1 = inlined_call_operand.hbm [shape: bf16[784,512], index: 1, kind: input, shape index: {}]
  %s2 = inlined_call_operand.vmem [shape: f32[1,512], index: 2, kind: input, shape index: {}]
  %s3 = inlined_call_operand.vmem [shape: f32[1,512], index: 3, kind: input, shape index: {}]
  %s4 = inlined_call_operand.vmem [shape: f32[1,512], index: 4, kind: input, shape index: {}]
  %s5 = inlined_call_operand.hbm [shape: bf16[512,512], index: 5, kind: input, shape index: {}]
  %s6 = inlined_call_operand.vmem [shape: f32[1,512], index: 6, kind: input, shape index: {}]
  %s7 = inlined_call_operand.vmem [shape: f32[1,512], index: 7, kind: input, shape index: {}]
  %s8 = inlined_call_operand.vmem [shape: f32[1,512], index: 8, kind: input, shape index: {}]
  %s9 = inlined_call_operand.vmem [shape: bf16[512,128], index: 9, kind: input, shape index: {}]
  %s10 = inlined_call_operand.vmem [shape: f32[1,128], index: 10, kind: input, shape index: {}]
  %s11 = inlined_call_operand.vmem [shape: bf16[8,128], index: 11, kind: output, shape index: {}]
  %s12 = sld [smem:[#allocation0]]
  $region62: #{ln_fmnist_mlp_forward.1} parent=0
    _
  %s14 = ssub.s32 1, %s12
  %s15 = scalar_select 0, %s14, %s12
  $region1: #{ln_fmnist_mlp_forward.1} parent=0
    #allocation2 [shape = 'u8[802816]{0}', space=vmem, size = 0xc4000, scoped, tag = 'input window, operand 1, single buffered']
    #allocation3 [shape = 's32[1]{0}', space=sflag, size = 0x4, scoped, tag = 'scoped memory for ln_fmnist_mlp_forward.1']
    #allocation4 [shape = 'u8[524288]{0}', space=vmem, size = 0x80000, scoped, tag = 'input window, operand 5, single buffered']
    #allocation5 [shape = 's32[1]{0}', space=sflag, size = 0x4, scoped, tag = 'scoped memory for ln_fmnist_mlp_forward.1']
    %16 = vsyncpa [#allocation3], 0
    %17 = vsyncpa [#allocation5], 0
    // Predicated region
    $region2: #{ln_fmnist_mlp_forward.1} parent=1 // pred_check
      _
    $region3: #{ln_fmnist_mlp_forward.1} parent=1 // pred_check_branch
      %19 = sbr.rel (0) target = $region5
    $region4: #{ln_fmnist_mlp_forward.1} parent=1 // pred_region
      _
    $region5: #{ln_fmnist_mlp_forward.1} parent=1 // pred_fallthru
      _
    // Predicated region
    $region6: #{ln_fmnist_mlp_forward.1} parent=1 // pred_check
      _
    $region7: #{ln_fmnist_mlp_forward.1} parent=1 // pred_check_branch
      %21 = sbr.rel (0) target = $region9
    $region8: #{ln_fmnist_mlp_forward.1} parent=1 // pred_region
      %s23 = ssub.s32 25088, 25088
      %24 = vsyncadd [#allocation3], %s23
      %s25 = sshll.u32 [#allocation2], 4
      %s26 = int_to_ptr.vmem [resolvable:$true] %s25
      %31 = dma.hbm_to_vmem [thread:$0]  %s1, 25088, %s26, [#allocation3], 256, 256, 16
    $region9: #{ln_fmnist_mlp_forward.1} parent=1 // pred_fallthru
      _
    // Predicated region
    $region10: #{ln_fmnist_mlp_forward.1} parent=1 // pred_check
      _
    $region11: #{ln_fmnist_mlp_forward.1} parent=1 // pred_check_branch
      %33 = sbr.rel (0) target = $region13
    $region12: #{ln_fmnist_mlp_forward.1} parent=1 // pred_region
      _
    $region13: #{ln_fmnist_mlp_forward.1} parent=1 // pred_fallthru
      _
    // Predicated region
    $region14: #{ln_fmnist_mlp_forward.1} parent=1 // pred_check
      _
    $region15: #{ln_fmnist_mlp_forward.1} parent=1 // pred_check_branch
      %35 = sbr.rel (0) target = $region17
    $region16: #{ln_fmnist_mlp_forward.1} parent=1 // pred_region
      _
    $region17: #{ln_fmnist_mlp_forward.1} parent=1 // pred_fallthru
      _
    // Predicated region
    $region18: #{ln_fmnist_mlp_forward.1} parent=1 // pred_check
      _
    $region19: #{ln_fmnist_mlp_forward.1} parent=1 // pred_check_branch
      %37 = sbr.rel (0) target = $region21
    $region20: #{ln_fmnist_mlp_forward.1} parent=1 // pred_region
      _
    $region21: #{ln_fmnist_mlp_forward.1} parent=1 // pred_fallthru
      _
    // Predicated region
    $region22: #{ln_fmnist_mlp_forward.1} parent=1 // pred_check
      _
    $region23: #{ln_fmnist_mlp_forward.1} parent=1 // pred_check_branch
      %39 = sbr.rel (0) target = $region25
    $region24: #{ln_fmnist_mlp_forward.1} parent=1 // pred_region
      %s41 = ssub.s32 16384, 16384
      %42 = vsyncadd [#allocation5], %s41
      %s43 = sshll.u32 [#allocation4], 4
      %s44 = int_to_ptr.vmem [resolvable:$true] %s43
      %49 = dma.hbm_to_vmem [thread:$0]  %s5, 16384, %s44, [#allocation5], 256, 256, 16
    $region25: #{ln_fmnist_mlp_forward.1} parent=1 // pred_fallthru
      _
    // Predicated region
    $region26: #{ln_fmnist_mlp_forward.1} parent=1 // pred_check
      _
    $region27: #{ln_fmnist_mlp_forward.1} parent=1 // pred_check_branch
      %51 = sbr.rel (0) target = $region29
    $region28: #{ln_fmnist_mlp_forward.1} parent=1 // pred_region
      _
    $region29: #{ln_fmnist_mlp_forward.1} parent=1 // pred_fallthru
      _
    // Predicated region
    $region30: #{ln_fmnist_mlp_forward.1} parent=1 // pred_check
      _
    $region31: #{ln_fmnist_mlp_forward.1} parent=1 // pred_check_branch
      %53 = sbr.rel (0) target = $region33
    $region32: #{ln_fmnist_mlp_forward.1} parent=1 // pred_region
      _
    $region33: #{ln_fmnist_mlp_forward.1} parent=1 // pred_fallthru
      _
    // Predicated region
    $region34: #{ln_fmnist_mlp_forward.1} parent=1 // pred_check
      _
    $region35: #{ln_fmnist_mlp_forward.1} parent=1 // pred_check_branch
      %55 = sbr.rel (0) target = $region37
    $region36: #{ln_fmnist_mlp_forward.1} parent=1 // pred_region
      _
    $region37: #{ln_fmnist_mlp_forward.1} parent=1 // pred_fallthru
      _
    // Predicated region
    $region38: #{ln_fmnist_mlp_forward.1} parent=1 // pred_check
      _
    $region39: #{ln_fmnist_mlp_forward.1} parent=1 // pred_check_branch
      %57 = sbr.rel (0) target = $region41
    $region40: #{ln_fmnist_mlp_forward.1} parent=1 // pred_region
      _
    $region41: #{ln_fmnist_mlp_forward.1} parent=1 // pred_fallthru
      _
    // Predicated region
    $region42: #{ln_fmnist_mlp_forward.1} parent=1 // pred_check
      _
    $region43: #{ln_fmnist_mlp_forward.1} parent=1 // pred_check_branch
      %59 = sbr.rel (0) target = $region45
    $region44: #{ln_fmnist_mlp_forward.1} parent=1 // pred_region
      _
    $region45: #{ln_fmnist_mlp_forward.1} parent=1 // pred_fallthru
      _
    // Predicated region
    $region46: #{ln_fmnist_mlp_forward.1} parent=1 // pred_check
      _
    $region47: #{ln_fmnist_mlp_forward.1} parent=1 // pred_check_branch
      %61 = sbr.rel (0) target = $region49
    $region48: #{ln_fmnist_mlp_forward.1} parent=1 // pred_region
      %62 = dma.done [#allocation3], 25088
    $region49: #{ln_fmnist_mlp_forward.1} parent=1 // pred_fallthru
      _
    // Predicated region
    $region50: #{ln_fmnist_mlp_forward.1} parent=1 // pred_check
      _
    $region51: #{ln_fmnist_mlp_forward.1} parent=1 // pred_check_branch
      %64 = sbr.rel (0) target = $region53
    $region52: #{ln_fmnist_mlp_forward.1} parent=1 // pred_region
      %65 = dma.done [#allocation5], 16384
    $region53: #{ln_fmnist_mlp_forward.1} parent=1 // pred_fallthru
      _
    %v67 = vld [vmem:[%s0] sm:$0xff]
    %v68 = vld [vmem:[%s0 + $0x8] sm:$0xff]
    %v69 = vld [vmem:[%s0 + $0x10] sm:$0xff]
    %v70 = vld [vmem:[%s0 + $0x18] sm:$0xff]
    %v71 = vld [vmem:[%s0 + $0x20] sm:$0xff]
    %v72 = vld [vmem:[%s0 + $0x28] sm:$0xff]
    %v73 = vld [vmem:[%s0 + $0x30] sm:$0xff]
    %v74 = vpack.c.bf16 %v67, %v67
    %v75 = vpack.c.bf16 %v68, %v68
    %v76 = vpack.c.bf16 %v69, %v69
    %v77 = vpack.c.bf16 %v70, %v70
    %v78 = vpack.c.bf16 %v71, %v71
    %v79 = vpack.c.bf16 %v72, %v72
    %v80 = vpack.c.bf16 %v73, %v73
    %v81 = vld [vmem:[#allocation2] sm:$0xff]
    %v82 = vld [vmem:[#allocation2 + $0x8] sm:$0xff]
    %v83 = vld [vmem:[#allocation2 + $0x10] sm:$0xff]
    %v84 = vld [vmem:[#allocation2 + $0x18] sm:$0xff]
    %v85 = vld [vmem:[#allocation2 + $0x20] sm:$0xff]
    %v86 = vld [vmem:[#allocation2 + $0x28] sm:$0xff]
    %v87 = vld [vmem:[#allocation2 + $0x30] sm:$0xff]
    %v88 = vld [vmem:[#allocation2 + $0x38] sm:$0xff]
    %v89 = vld [vmem:[#allocation2 + $0x40] sm:$0xff]
    %v90 = vld [vmem:[#allocation2 + $0x48] sm:$0xff]
    %v91 = vld [vmem:[#allocation2 + $0x50] sm:$0xff]
    %v92 = vld [vmem:[#allocation2 + $0x58] sm:$0xff]
    %v93 = vld [vmem:[#allocation2 + $0x60] sm:$0xff]
    %v94 = vld [vmem:[#allocation2 + $0x68] sm:$0xff]
    %v95 = vld [vmem:[#allocation2 + $0x70] sm:$0xff]
    %v96 = vld [vmem:[#allocation2 + $0x78] sm:$0xff]
    %v97 = vld [vmem:[#allocation2 + $0x80] sm:$0xff]
    %v98 = vld [vmem:[#allocation2 + $0x88] sm:$0xff]
    %v99 = vld [vmem:[#allocation2 + $0x90] sm:$0xff]
    %v100 = vld [vmem:[#allocation2 + $0x98] sm:$0xff]
    %v101 = vld [vmem:[#allocation2 + $0xa0] sm:$0xff]
    %v102 = vld [vmem:[#allocation2 + $0xa8] sm:$0xff]
    %v103 = vld [vmem:[#allocation2 + $0xb0] sm:$0xff]
    %v104 = vld [vmem:[#allocation2 + $0xb8] sm:$0xff]
    %v105 = vld [vmem:[#allocation2 + $0xc0] sm:$0xff]
    %v106 = vld [vmem:[#allocation2 + $0xc8] sm:$0xff]
    %v107 = vld [vmem:[#allocation2 + $0xd0] sm:$0xff]
    %v108 = vld [vmem:[#allocation2 + $0xd8] sm:$0xff]
    %v109 = vld [vmem:[#allocation2 + $0xe0] sm:$0xff]
    %v110 = vld [vmem:[#allocation2 + $0xe8] sm:$0xff]
    %v111 = vld [vmem:[#allocation2 + $0xf0] sm:$0xff]
    %v112 = vld [vmem:[#allocation2 + $0xf8] sm:$0xff]
    %v113 = vld [vmem:[#allocation2 + $0x100] sm:$0xff]
    %v114 = vld [vmem:[#allocation2 + $0x108] sm:$0xff]
    %v115 = vld [vmem:[#allocation2 + $0x110] sm:$0xff]
    %v116 = vld [vmem:[#allocation2 + $0x118] sm:$0xff]
    %v117 = vld [vmem:[#allocation2 + $0x120] sm:$0xff]
    %v118 = vld [vmem:[#allocation2 + $0x128] sm:$0xff]
    %v119 = vld [vmem:[#allocation2 + $0x130] sm:$0xff]
    %v120 = vld [vmem:[#allocation2 + $0x138] sm:$0xff]
    %v121 = vld [vmem:[#allocation2 + $0x140] sm:$0xff]
    %v122 = vld [vmem:[#allocation2 + $0x148] sm:$0xff]
    %v123 = vld [vmem:[#allocation2 + $0x150] sm:$0xff]
    %v124 = vld [vmem:[#allocation2 + $0x158] sm:$0xff]
    %v125 = vld [vmem:[#allocation2 + $0x160] sm:$0xff]
    %v126 = vld [vmem:[#allocation2 + $0x168] sm:$0xff]
    %v127 = vld [vmem:[#allocation2 + $0x170] sm:$0xff]
    %v128 = vld [vmem:[#allocation2 + $0x178] sm:$0xff]
    %v129 = vld [vmem:[#allocation2 + $0x180] sm:$0xff]
    %v130 = vld [vmem:[#allocation2 + $0x188] sm:$0xff]
    %v131 = vld [vmem:[#allocation2 + $0x190] sm:$0xff]
    %v132 = vld [vmem:[#allocation2 + $0x198] sm:$0xff]
    %v133 = vld [vmem:[#allocation2 + $0x1a0] sm:$0xff]
    %v134 = vld [vmem:[#allocation2 + $0x1a8] sm:$0xff]
    %v135 = vld [vmem:[#allocation2 + $0x1b0] sm:$0xff]
    %v136 = vld [vmem:[#allocation2 + $0x1b8] sm:$0xff]
    %v137 = vld [vmem:[#allocation2 + $0x1c0] sm:$0xff]
    %v138 = vld [vmem:[#allocation2 + $0x1c8] sm:$0xff]
    %v139 = vld [vmem:[#allocation2 + $0x1d0] sm:$0xff]
    %v140 = vld [vmem:[#allocation2 + $0x1d8] sm:$0xff]
    %v141 = vld [vmem:[#allocation2 + $0x1e0] sm:$0xff]
    %v142 = vld [vmem:[#allocation2 + $0x1e8] sm:$0xff]
    %v143 = vld [vmem:[#allocation2 + $0x1f0] sm:$0xff]
    %v144 = vld [vmem:[#allocation2 + $0x1f8] sm:$0xff]
    %v145 = vld [vmem:[#allocation2 + $0x200] sm:$0xff]
    %v146 = vld [vmem:[#allocation2 + $0x208] sm:$0xff]
    %v147 = vld [vmem:[#allocation2 + $0x210] sm:$0xff]
    %v148 = vld [vmem:[#allocation2 + $0x218] sm:$0xff]
    %v149 = vld [vmem:[#allocation2 + $0x220] sm:$0xff]
    %v150 = vld [vmem:[#allocation2 + $0x228] sm:$0xff]
    %v151 = vld [vmem:[#allocation2 + $0x230] sm:$0xff]
    %v152 = vld [vmem:[#allocation2 + $0x238] sm:$0xff]
    %v153 = vld [vmem:[#allocation2 + $0x240] sm:$0xff]
    %v154 = vld [vmem:[#allocation2 + $0x248] sm:$0xff]
    %v155 = vld [vmem:[#allocation2 + $0x250] sm:$0xff]
    %v156 = vld [vmem:[#allocation2 + $0x258] sm:$0xff]
    %v157 = vld [vmem:[#allocation2 + $0x260] sm:$0xff]
    %v158 = vld [vmem:[#allocation2 + $0x268] sm:$0xff]
    %v159 = vld [vmem:[#allocation2 + $0x270] sm:$0xff]
    %v160 = vld [vmem:[#allocation2 + $0x278] sm:$0xff]
    %v161 = vld [vmem:[#allocation2 + $0x280] sm:$0xff]
    %v162 = vld [vmem:[#allocation2 + $0x288] sm:$0xff]
    %v163 = vld [vmem:[#allocation2 + $0x290] sm:$0xff]
    %v164 = vld [vmem:[#allocation2 + $0x298] sm:$0xff]
    %v165 = vld [vmem:[#allocation2 + $0x2a0] sm:$0xff]
    %v166 = vld [vmem:[#allocation2 + $0x2a8] sm:$0xff]
    %v167 = vld [vmem:[#allocation2 + $0x2b0] sm:$0xff]
    %v168 = vld [vmem:[#allocation2 + $0x2b8] sm:$0xff]
    %v169 = vld [vmem:[#allocation2 + $0x2c0] sm:$0xff]
    %v170 = vld [vmem:[#allocation2 + $0x2c8] sm:$0xff]
    %v171 = vld [vmem:[#allocation2 + $0x2d0] sm:$0xff]
    %v172 = vld [vmem:[#allocation2 + $0x2d8] sm:$0xff]
    %v173 = vld [vmem:[#allocation2 + $0x2e0] sm:$0xff]
    %v174 = vld [vmem:[#allocation2 + $0x2e8] sm:$0xff]
    %v175 = vld [vmem:[#allocation2 + $0x2f0] sm:$0xff]
    %v176 = vld [vmem:[#allocation2 + $0x2f8] sm:$0xff]
    %v177 = vld [vmem:[#allocation2 + $0x300] sm:$0xff]
    %v178 = vld [vmem:[#allocation2 + $0x308] sm:$0xff]
    %v179 = vld [vmem:[#allocation2 + $0x310] sm:$0xff]
    %v180 = vld [vmem:[#allocation2 + $0x318] sm:$0xff]
    %v181 = vld [vmem:[#allocation2 + $0x320] sm:$0xff]
    %v182 = vld [vmem:[#allocation2 + $0x328] sm:$0xff]
    %v183 = vld [vmem:[#allocation2 + $0x330] sm:$0xff]
    %v184 = vld [vmem:[#allocation2 + $0x338] sm:$0xff]
    %v185 = vld [vmem:[#allocation2 + $0x340] sm:$0xff]
    %v186 = vld [vmem:[#allocation2 + $0x348] sm:$0xff]
    %v187 = vld [vmem:[#allocation2 + $0x350] sm:$0xff]
    %v188 = vld [vmem:[#allocation2 + $0x358] sm:$0xff]
    %v189 = vld [vmem:[#allocation2 + $0x360] sm:$0xff]
    %v190 = vld [vmem:[#allocation2 + $0x368] sm:$0xff]
    %v191 = vld [vmem:[#allocation2 + $0x370] sm:$0xff]
    %v192 = vld [vmem:[#allocation2 + $0x378] sm:$0xff]
    %v193 = vld [vmem:[#allocation2 + $0x380] sm:$0xff]
    %v194 = vld [vmem:[#allocation2 + $0x388] sm:$0xff]
    %v195 = vld [vmem:[#allocation2 + $0x390] sm:$0xff]
    %v196 = vld [vmem:[#allocation2 + $0x398] sm:$0xff]
    %v197 = vld [vmem:[#allocation2 + $0x3a0] sm:$0xff]
    %v198 = vld [vmem:[#allocation2 + $0x3a8] sm:$0xff]
    %v199 = vld [vmem:[#allocation2 + $0x3b0] sm:$0xff]
    %v200 = vld [vmem:[#allocation2 + $0x3b8] sm:$0xff]
    %v201 = vld [vmem:[#allocation2 + $0x3c0] sm:$0xff]
    %v202 = vld [vmem:[#allocation2 + $0x3c8] sm:$0xff]
    %v203 = vld [vmem:[#allocation2 + $0x3d0] sm:$0xff]
    %v204 = vld [vmem:[#allocation2 + $0x3d8] sm:$0xff]
    %v205 = vld [vmem:[#allocation2 + $0x3e0] sm:$0xff]
    %v206 = vld [vmem:[#allocation2 + $0x3e8] sm:$0xff]
    %v207 = vld [vmem:[#allocation2 + $0x3f0] sm:$0xff]
    %v208 = vld [vmem:[#allocation2 + $0x3f8] sm:$0xff]
    %v209 = vld [vmem:[#allocation2 + $0x400] sm:$0xff]
    %v210 = vld [vmem:[#allocation2 + $0x408] sm:$0xff]
    %v211 = vld [vmem:[#allocation2 + $0x410] sm:$0xff]
    %v212 = vld [vmem:[#allocation2 + $0x418] sm:$0xff]
    %v213 = vld [vmem:[#allocation2 + $0x420] sm:$0xff]
    %v214 = vld [vmem:[#allocation2 + $0x428] sm:$0xff]
    %v215 = vld [vmem:[#allocation2 + $0x430] sm:$0xff]
    %v216 = vld [vmem:[#allocation2 + $0x438] sm:$0xff]
    %v217 = vld [vmem:[#allocation2 + $0x440] sm:$0xff]
    %v218 = vld [vmem:[#allocation2 + $0x448] sm:$0xff]
    %v219 = vld [vmem:[#allocation2 + $0x450] sm:$0xff]
    %v220 = vld [vmem:[#allocation2 + $0x458] sm:$0xff]
    %v221 = vld [vmem:[#allocation2 + $0x460] sm:$0xff]
    %v222 = vld [vmem:[#allocation2 + $0x468] sm:$0xff]
    %v223 = vld [vmem:[#allocation2 + $0x470] sm:$0xff]
    %v224 = vld [vmem:[#allocation2 + $0x478] sm:$0xff]
    %v225 = vld [vmem:[#allocation2 + $0x480] sm:$0xff]
    %v226 = vld [vmem:[#allocation2 + $0x488] sm:$0xff]
    %v227 = vld [vmem:[#allocation2 + $0x490] sm:$0xff]
    %v228 = vld [vmem:[#allocation2 + $0x498] sm:$0xff]
    %v229 = vld [vmem:[#allocation2 + $0x4a0] sm:$0xff]
    %v230 = vld [vmem:[#allocation2 + $0x4a8] sm:$0xff]
    %v231 = vld [vmem:[#allocation2 + $0x4b0] sm:$0xff]
    %v232 = vld [vmem:[#allocation2 + $0x4b8] sm:$0xff]
    %v233 = vld [vmem:[#allocation2 + $0x4c0] sm:$0xff]
    %v234 = vld [vmem:[#allocation2 + $0x4c8] sm:$0xff]
    %v235 = vld [vmem:[#allocation2 + $0x4d0] sm:$0xff]
    %v236 = vld [vmem:[#allocation2 + $0x4d8] sm:$0xff]
    %v237 = vld [vmem:[#allocation2 + $0x4e0] sm:$0xff]
    %v238 = vld [vmem:[#allocation2 + $0x4e8] sm:$0xff]
    %v239 = vld [vmem:[#allocation2 + $0x4f0] sm:$0xff]
    %v240 = vld [vmem:[#allocation2 + $0x4f8] sm:$0xff]
    %v241 = vld [vmem:[#allocation2 + $0x500] sm:$0xff]
    %v242 = vld [vmem:[#allocation2 + $0x508] sm:$0xff]
    %v243 = vld [vmem:[#allocation2 + $0x510] sm:$0xff]
    %v244 = vld [vmem:[#allocation2 + $0x518] sm:$0xff]
    %v245 = vld [vmem:[#allocation2 + $0x520] sm:$0xff]
    %v246 = vld [vmem:[#allocation2 + $0x528] sm:$0xff]
    %v247 = vld [vmem:[#allocation2 + $0x530] sm:$0xff]
    %v248 = vld [vmem:[#allocation2 + $0x538] sm:$0xff]
    %v249 = vld [vmem:[#allocation2 + $0x540] sm:$0xff]
    %v250 = vld [vmem:[#allocation2 + $0x548] sm:$0xff]
    %v251 = vld [vmem:[#allocation2 + $0x550] sm:$0xff]
    %v252 = vld [vmem:[#allocation2 + $0x558] sm:$0xff]
    %v253 = vld [vmem:[#allocation2 + $0x560] sm:$0xff]
    %v254 = vld [vmem:[#allocation2 + $0x568] sm:$0xff]
    %v255 = vld [vmem:[#allocation2 + $0x570] sm:$0xff]
    %v256 = vld [vmem:[#allocation2 + $0x578] sm:$0xff]
    %v257 = vld [vmem:[#allocation2 + $0x580] sm:$0xff]
    %v258 = vld [vmem:[#allocation2 + $0x588] sm:$0xff]
    %v259 = vld [vmem:[#allocation2 + $0x590] sm:$0xff]
    %v260 = vld [vmem:[#allocation2 + $0x598] sm:$0xff]
    %v261 = vld [vmem:[#allocation2 + $0x5a0] sm:$0xff]
    %v262 = vld [vmem:[#allocation2 + $0x5a8] sm:$0xff]
    %v263 = vld [vmem:[#allocation2 + $0x5b0] sm:$0xff]
    %v264 = vld [vmem:[#allocation2 + $0x5b8] sm:$0xff]
    %v265 = vld [vmem:[#allocation2 + $0x5c0] sm:$0xff]
    %v266 = vld [vmem:[#allocation2 + $0x5c8] sm:$0xff]
    %v267 = vld [vmem:[#allocation2 + $0x5d0] sm:$0xff]
    %v268 = vld [vmem:[#allocation2 + $0x5d8] sm:$0xff]
    %v269 = vld [vmem:[#allocation2 + $0x5e0] sm:$0xff]
    %v270 = vld [vmem:[#allocation2 + $0x5e8] sm:$0xff]
    %v271 = vld [vmem:[#allocation2 + $0x5f0] sm:$0xff]
    %v272 = vld [vmem:[#allocation2 + $0x5f8] sm:$0xff]
    %v273 = vld [vmem:[#allocation2 + $0x600] sm:$0xff]
    %v274 = vld [vmem:[#allocation2 + $0x608] sm:$0xff]
    %v275 = vld [vmem:[#allocation2 + $0x610] sm:$0xff]
    %v276 = vld [vmem:[#allocation2 + $0x618] sm:$0xff]
    %v277 = vld [vmem:[%s2] sm:$0xf]
    %v279 = vlaneseq
    %v280 = vshrl.u32 %v279, 7
    %v281 = vsub.s32 0, %v280
    %v282 = vrot.slane %v277, %v281
    %v283 = vlaneseq
    %v284 = vshrl.u32 %v283, 7
    %v285 = vsub.s32 1, %v284
    %v286 = vrot.slane %v277, %v285
    %v287 = vlaneseq
    %v288 = vshrl.u32 %v287, 7
    %v289 = vsub.s32 2, %v288
    %v290 = vrot.slane %v277, %v289
    %v291 = vlaneseq
    %v292 = vshrl.u32 %v291, 7
    %v293 = vsub.s32 3, %v292
    %v294 = vrot.slane %v277, %v293
    %v495 = vunpack.c.l.b16 %v81
    %v496 = vunpack.c.h.b16 %v81
    %v497 = vunpack.c.l.b16 %v82
    %v498 = vunpack.c.h.b16 %v82
    %v499 = vunpack.c.l.b16 %v83
    %v500 = vunpack.c.h.b16 %v83
    %v501 = vunpack.c.l.b16 %v84
    %v502 = vunpack.c.h.b16 %v84
    %v503 = vunpack.c.l.b16 %v85
    %v504 = vunpack.c.h.b16 %v85
    %v505 = vunpack.c.l.b16 %v86
    %v506 = vunpack.c.h.b16 %v86
    %v507 = vunpack.c.l.b16 %v87
    %v508 = vunpack.c.h.b16 %v87
    %v509 = vunpack.c.l.b16 %v88
    %v510 = vunpack.c.h.b16 %v88
    %v511 = vunpack.c.l.b16 %v89
    %v512 = vunpack.c.h.b16 %v89
    %v513 = vunpack.c.l.b16 %v90
    %v514 = vunpack.c.h.b16 %v90
    %v515 = vunpack.c.l.b16 %v91
    %v516 = vunpack.c.h.b16 %v91
    %v517 = vunpack.c.l.b16 %v92
    %v518 = vunpack.c.h.b16 %v92
    %v519 = vunpack.c.l.b16 %v93
    %v520 = vunpack.c.h.b16 %v93
    %v521 = vunpack.c.l.b16 %v94
    %v522 = vunpack.c.h.b16 %v94
    %v523 = vunpack.c.l.b16 %v95
    %v524 = vunpack.c.h.b16 %v95
    %v525 = vunpack.c.l.b16 %v96
    %v526 = vunpack.c.h.b16 %v96
    %v527 = vunpack.c.l.b16 %v97
    %v528 = vunpack.c.h.b16 %v97
    %v529 = vunpack.c.l.b16 %v98
    %v530 = vunpack.c.h.b16 %v98
    %v531 = vunpack.c.l.b16 %v99
    %v532 = vunpack.c.h.b16 %v99
    %v533 = vunpack.c.l.b16 %v100
    %v534 = vunpack.c.h.b16 %v100
    %v535 = vunpack.c.l.b16 %v101
    %v536 = vunpack.c.h.b16 %v101
    %v537 = vunpack.c.l.b16 %v102
    %v538 = vunpack.c.h.b16 %v102
    %v539 = vunpack.c.l.b16 %v103
    %v540 = vunpack.c.h.b16 %v103
    %v541 = vunpack.c.l.b16 %v104
    %v542 = vunpack.c.h.b16 %v104
    %v543 = vunpack.c.l.b16 %v105
    %v544 = vunpack.c.h.b16 %v105
    %v545 = vunpack.c.l.b16 %v106
    %v546 = vunpack.c.h.b16 %v106
    %v547 = vunpack.c.l.b16 %v107
    %v548 = vunpack.c.h.b16 %v107
    %v549 = vunpack.c.l.b16 %v108
    %v550 = vunpack.c.h.b16 %v108
    %v551 = vunpack.c.l.b16 %v109
    %v552 = vunpack.c.h.b16 %v109
    %v553 = vunpack.c.l.b16 %v110
    %v554 = vunpack.c.h.b16 %v110
    %v555 = vunpack.c.l.b16 %v111
    %v556 = vunpack.c.h.b16 %v111
    %v557 = vunpack.c.l.b16 %v112
    %v558 = vunpack.c.h.b16 %v112
    %v559 = vunpack.c.l.b16 %v113
    %v560 = vunpack.c.h.b16 %v113
    %v561 = vunpack.c.l.b16 %v114
    %v562 = vunpack.c.h.b16 %v114
    %v563 = vunpack.c.l.b16 %v115
    %v564 = vunpack.c.h.b16 %v115
    %v565 = vunpack.c.l.b16 %v116
    %v566 = vunpack.c.h.b16 %v116
    %v567 = vunpack.c.l.b16 %v117
    %v568 = vunpack.c.h.b16 %v117
    %v569 = vunpack.c.l.b16 %v118
    %v570 = vunpack.c.h.b16 %v118
    %v571 = vunpack.c.l.b16 %v119
    %v572 = vunpack.c.h.b16 %v119
    %v573 = vunpack.c.l.b16 %v120
    %v574 = vunpack.c.h.b16 %v120
    %v575 = vunpack.c.l.b16 %v121
    %v576 = vunpack.c.h.b16 %v121
    %v577 = vunpack.c.l.b16 %v122
    %v578 = vunpack.c.h.b16 %v122
    %v579 = vunpack.c.l.b16 %v123
    %v580 = vunpack.c.h.b16 %v123
    %v581 = vunpack.c.l.b16 %v124
    %v582 = vunpack.c.h.b16 %v124
    %v583 = vunpack.c.l.b16 %v125
    %v584 = vunpack.c.h.b16 %v125
    %v585 = vunpack.c.l.b16 %v126
    %v586 = vunpack.c.h.b16 %v126
    %v587 = vunpack.c.l.b16 %v127
    %v588 = vunpack.c.h.b16 %v127
    %v589 = vunpack.c.l.b16 %v128
    %v590 = vunpack.c.h.b16 %v128
    %v591 = vunpack.c.l.b16 %v129
    %v592 = vunpack.c.h.b16 %v129
    %v593 = vunpack.c.l.b16 %v130
    %v594 = vunpack.c.h.b16 %v130
    %v595 = vunpack.c.l.b16 %v131
    %v596 = vunpack.c.h.b16 %v131
    %v597 = vunpack.c.l.b16 %v132
    %v598 = vunpack.c.h.b16 %v132
    %v599 = vunpack.c.l.b16 %v133
    %v600 = vunpack.c.h.b16 %v133
    %v601 = vunpack.c.l.b16 %v134
    %v602 = vunpack.c.h.b16 %v134
    %v603 = vunpack.c.l.b16 %v135
    %v604 = vunpack.c.h.b16 %v135
    %v605 = vunpack.c.l.b16 %v136
    %v606 = vunpack.c.h.b16 %v136
    %v607 = vunpack.c.l.b16 %v137
    %v608 = vunpack.c.h.b16 %v137
    %v609 = vunpack.c.l.b16 %v138
    %v610 = vunpack.c.h.b16 %v138
    %v611 = vunpack.c.l.b16 %v139
    %v612 = vunpack.c.h.b16 %v139
    %v613 = vunpack.c.l.b16 %v140
    %v614 = vunpack.c.h.b16 %v140
    %v615 = vunpack.c.l.b16 %v141
    %v616 = vunpack.c.h.b16 %v141
    %v617 = vunpack.c.l.b16 %v142
    %v618 = vunpack.c.h.b16 %v142
    %v619 = vunpack.c.l.b16 %v143
    %v620 = vunpack.c.h.b16 %v143
    %v621 = vunpack.c.l.b16 %v144
    %v622 = vunpack.c.h.b16 %v144
    %v623 = vunpack.c.l.b16 %v145
    %v624 = vunpack.c.h.b16 %v145
    %v625 = vunpack.c.l.b16 %v146
    %v626 = vunpack.c.h.b16 %v146
    %v627 = vunpack.c.l.b16 %v147
    %v628 = vunpack.c.h.b16 %v147
    %v629 = vunpack.c.l.b16 %v148
    %v630 = vunpack.c.h.b16 %v148
    %v631 = vunpack.c.l.b16 %v149
    %v632 = vunpack.c.h.b16 %v149
    %v633 = vunpack.c.l.b16 %v150
    %v634 = vunpack.c.h.b16 %v150
    %v635 = vunpack.c.l.b16 %v151
    %v636 = vunpack.c.h.b16 %v151
    %v637 = vunpack.c.l.b16 %v152
    %v638 = vunpack.c.h.b16 %v152
    %v639 = vunpack.c.l.b16 %v153
    %v640 = vunpack.c.h.b16 %v153
    %v641 = vunpack.c.l.b16 %v154
    %v642 = vunpack.c.h.b16 %v154
    %v643 = vunpack.c.l.b16 %v155
    %v644 = vunpack.c.h.b16 %v155
    %v645 = vunpack.c.l.b16 %v156
    %v646 = vunpack.c.h.b16 %v156
    %v647 = vunpack.c.l.b16 %v157
    %v648 = vunpack.c.h.b16 %v157
    %v649 = vunpack.c.l.b16 %v158
    %v650 = vunpack.c.h.b16 %v158
    %v651 = vunpack.c.l.b16 %v159
    %v652 = vunpack.c.h.b16 %v159
    %v653 = vunpack.c.l.b16 %v160
    %v654 = vunpack.c.h.b16 %v160
    %v655 = vunpack.c.l.b16 %v161
    %v656 = vunpack.c.h.b16 %v161
    %v657 = vunpack.c.l.b16 %v162
    %v658 = vunpack.c.h.b16 %v162
    %v659 = vunpack.c.l.b16 %v163
    %v660 = vunpack.c.h.b16 %v163
    %v661 = vunpack.c.l.b16 %v164
    %v662 = vunpack.c.h.b16 %v164
    %v663 = vunpack.c.l.b16 %v165
    %v664 = vunpack.c.h.b16 %v165
    %v665 = vunpack.c.l.b16 %v166
    %v666 = vunpack.c.h.b16 %v166
    %v667 = vunpack.c.l.b16 %v167
    %v668 = vunpack.c.h.b16 %v167
    %v669 = vunpack.c.l.b16 %v168
    %v670 = vunpack.c.h.b16 %v168
    %v671 = vunpack.c.l.b16 %v169
    %v672 = vunpack.c.h.b16 %v169
    %v673 = vunpack.c.l.b16 %v170
    %v674 = vunpack.c.h.b16 %v170
    %v675 = vunpack.c.l.b16 %v171
    %v676 = vunpack.c.h.b16 %v171
    %v677 = vunpack.c.l.b16 %v172
    %v678 = vunpack.c.h.b16 %v172
    %v679 = vunpack.c.l.b16 %v173
    %v680 = vunpack.c.h.b16 %v173
    %v681 = vunpack.c.l.b16 %v174
    %v682 = vunpack.c.h.b16 %v174
    %v683 = vunpack.c.l.b16 %v175
    %v684 = vunpack.c.h.b16 %v175
    %v685 = vunpack.c.l.b16 %v176
    %v686 = vunpack.c.h.b16 %v176
    %v687 = vunpack.c.l.b16 %v177
    %v688 = vunpack.c.h.b16 %v177
    %v689 = vunpack.c.l.b16 %v178
    %v690 = vunpack.c.h.b16 %v178
    %v691 = vunpack.c.l.b16 %v179
    %v692 = vunpack.c.h.b16 %v179
    %v693 = vunpack.c.l.b16 %v180
    %v694 = vunpack.c.h.b16 %v180
    %v695 = vunpack.c.l.b16 %v181
    %v696 = vunpack.c.h.b16 %v181
    %v697 = vunpack.c.l.b16 %v182
    %v698 = vunpack.c.h.b16 %v182
    %v699 = vunpack.c.l.b16 %v183
    %v700 = vunpack.c.h.b16 %v183
    %v701 = vunpack.c.l.b16 %v184
    %v702 = vunpack.c.h.b16 %v184
    %v703 = vunpack.c.l.b16 %v185
    %v704 = vunpack.c.h.b16 %v185
    %v705 = vunpack.c.l.b16 %v186
    %v706 = vunpack.c.h.b16 %v186
    %v707 = vunpack.c.l.b16 %v187
    %v708 = vunpack.c.h.b16 %v187
    %v709 = vunpack.c.l.b16 %v188
    %v710 = vunpack.c.h.b16 %v188
    %v711 = vunpack.c.l.b16 %v189
    %v712 = vunpack.c.h.b16 %v189
    %v713 = vunpack.c.l.b16 %v190
    %v714 = vunpack.c.h.b16 %v190
    %v715 = vunpack.c.l.b16 %v191
    %v716 = vunpack.c.h.b16 %v191
    %v717 = vunpack.c.l.b16 %v192
    %v718 = vunpack.c.h.b16 %v192
    %v719 = vunpack.c.l.b16 %v193
    %v720 = vunpack.c.h.b16 %v193
    %v721 = vunpack.c.l.b16 %v194
    %v722 = vunpack.c.h.b16 %v194
    %v723 = vunpack.c.l.b16 %v195
    %v724 = vunpack.c.h.b16 %v195
    %v725 = vunpack.c.l.b16 %v196
    %v726 = vunpack.c.h.b16 %v196
    %v727 = vunpack.c.l.b16 %v197
    %v728 = vunpack.c.h.b16 %v197
    %v729 = vunpack.c.l.b16 %v198
    %v730 = vunpack.c.h.b16 %v198
    %v731 = vunpack.c.l.b16 %v199
    %v732 = vunpack.c.h.b16 %v199
    %v733 = vunpack.c.l.b16 %v200
    %v734 = vunpack.c.h.b16 %v200
    %v735 = vunpack.c.l.b16 %v201
    %v736 = vunpack.c.h.b16 %v201
    %v737 = vunpack.c.l.b16 %v202
    %v738 = vunpack.c.h.b16 %v202
    %v739 = vunpack.c.l.b16 %v203
    %v740 = vunpack.c.h.b16 %v203
    %v741 = vunpack.c.l.b16 %v204
    %v742 = vunpack.c.h.b16 %v204
    %v743 = vunpack.c.l.b16 %v205
    %v744 = vunpack.c.h.b16 %v205
    %v745 = vunpack.c.l.b16 %v206
    %v746 = vunpack.c.h.b16 %v206
    %v747 = vunpack.c.l.b16 %v207
    %v748 = vunpack.c.h.b16 %v207
    %v749 = vunpack.c.l.b16 %v208
    %v750 = vunpack.c.h.b16 %v208
    %v751 = vunpack.c.l.b16 %v209
    %v752 = vunpack.c.h.b16 %v209
    %v753 = vunpack.c.l.b16 %v210
    %v754 = vunpack.c.h.b16 %v210
    %v755 = vunpack.c.l.b16 %v211
    %v756 = vunpack.c.h.b16 %v211
    %v757 = vunpack.c.l.b16 %v212
    %v758 = vunpack.c.h.b16 %v212
    %v759 = vunpack.c.l.b16 %v213
    %v760 = vunpack.c.h.b16 %v213
    %v761 = vunpack.c.l.b16 %v214
    %v762 = vunpack.c.h.b16 %v214
    %v763 = vunpack.c.l.b16 %v215
    %v764 = vunpack.c.h.b16 %v215
    %v765 = vunpack.c.l.b16 %v216
    %v766 = vunpack.c.h.b16 %v216
    %v767 = vunpack.c.l.b16 %v217
    %v768 = vunpack.c.h.b16 %v217
    %v769 = vunpack.c.l.b16 %v218
    %v770 = vunpack.c.h.b16 %v218
    %v771 = vunpack.c.l.b16 %v219
    %v772 = vunpack.c.h.b16 %v219
    %v773 = vunpack.c.l.b16 %v220
    %v774 = vunpack.c.h.b16 %v220
    %v775 = vunpack.c.l.b16 %v221
    %v776 = vunpack.c.h.b16 %v221
    %v777 = vunpack.c.l.b16 %v222
    %v778 = vunpack.c.h.b16 %v222
    %v779 = vunpack.c.l.b16 %v223
    %v780 = vunpack.c.h.b16 %v223
    %v781 = vunpack.c.l.b16 %v224
    %v782 = vunpack.c.h.b16 %v224
    %v783 = vunpack.c.l.b16 %v225
    %v784 = vunpack.c.h.b16 %v225
    %v785 = vunpack.c.l.b16 %v226
    %v786 = vunpack.c.h.b16 %v226
    %v787 = vunpack.c.l.b16 %v227
    %v788 = vunpack.c.h.b16 %v227
    %v789 = vunpack.c.l.b16 %v228
    %v790 = vunpack.c.h.b16 %v228
    %v791 = vunpack.c.l.b16 %v229
    %v792 = vunpack.c.h.b16 %v229
    %v793 = vunpack.c.l.b16 %v230
    %v794 = vunpack.c.h.b16 %v230
    %v795 = vunpack.c.l.b16 %v231
    %v796 = vunpack.c.h.b16 %v231
    %v797 = vunpack.c.l.b16 %v232
    %v798 = vunpack.c.h.b16 %v232
    %v799 = vunpack.c.l.b16 %v233
    %v800 = vunpack.c.h.b16 %v233
    %v801 = vunpack.c.l.b16 %v234
    %v802 = vunpack.c.h.b16 %v234
    %v803 = vunpack.c.l.b16 %v235
    %v804 = vunpack.c.h.b16 %v235
    %v805 = vunpack.c.l.b16 %v236
    %v806 = vunpack.c.h.b16 %v236
    %v807 = vunpack.c.l.b16 %v237
    %v808 = vunpack.c.h.b16 %v237
    %v809 = vunpack.c.l.b16 %v238
    %v810 = vunpack.c.h.b16 %v238
    %v811 = vunpack.c.l.b16 %v239
    %v812 = vunpack.c.h.b16 %v239
    %v813 = vunpack.c.l.b16 %v240
    %v814 = vunpack.c.h.b16 %v240
    %v815 = vunpack.c.l.b16 %v241
    %v816 = vunpack.c.h.b16 %v241
    %v817 = vunpack.c.l.b16 %v242
    %v818 = vunpack.c.h.b16 %v242
    %v819 = vunpack.c.l.b16 %v243
    %v820 = vunpack.c.h.b16 %v243
    %v821 = vunpack.c.l.b16 %v244
    %v822 = vunpack.c.h.b16 %v244
    %v823 = vunpack.c.l.b16 %v245
    %v824 = vunpack.c.h.b16 %v245
    %v825 = vunpack.c.l.b16 %v246
    %v826 = vunpack.c.h.b16 %v246
    %v827 = vunpack.c.l.b16 %v247
    %v828 = vunpack.c.h.b16 %v247
    %v829 = vunpack.c.l.b16 %v248
    %v830 = vunpack.c.h.b16 %v248
    %v831 = vunpack.c.l.b16 %v249
    %v832 = vunpack.c.h.b16 %v249
    %v833 = vunpack.c.l.b16 %v250
    %v834 = vunpack.c.h.b16 %v250
    %v835 = vunpack.c.l.b16 %v251
    %v836 = vunpack.c.h.b16 %v251
    %v837 = vunpack.c.l.b16 %v252
    %v838 = vunpack.c.h.b16 %v252
    %v839 = vunpack.c.l.b16 %v253
    %v840 = vunpack.c.h.b16 %v253
    %v841 = vunpack.c.l.b16 %v254
    %v842 = vunpack.c.h.b16 %v254
    %v843 = vunpack.c.l.b16 %v255
    %v844 = vunpack.c.h.b16 %v255
    %v845 = vunpack.c.l.b16 %v256
    %v846 = vunpack.c.h.b16 %v256
    %v847 = vunpack.c.l.b16 %v257
    %v848 = vunpack.c.h.b16 %v257
    %v849 = vunpack.c.l.b16 %v258
    %v850 = vunpack.c.h.b16 %v258
    %v851 = vunpack.c.l.b16 %v259
    %v852 = vunpack.c.h.b16 %v259
    %v853 = vunpack.c.l.b16 %v260
    %v854 = vunpack.c.h.b16 %v260
    %v855 = vunpack.c.l.b16 %v261
    %v856 = vunpack.c.h.b16 %v261
    %v857 = vunpack.c.l.b16 %v262
    %v858 = vunpack.c.h.b16 %v262
    %v859 = vunpack.c.l.b16 %v263
    %v860 = vunpack.c.h.b16 %v263
    %v861 = vunpack.c.l.b16 %v264
    %v862 = vunpack.c.h.b16 %v264
    %v863 = vunpack.c.l.b16 %v265
    %v864 = vunpack.c.h.b16 %v265
    %v865 = vunpack.c.l.b16 %v266
    %v866 = vunpack.c.h.b16 %v266
    %v867 = vunpack.c.l.b16 %v267
    %v868 = vunpack.c.h.b16 %v267
    %v869 = vunpack.c.l.b16 %v268
    %v870 = vunpack.c.h.b16 %v268
    %v871 = vunpack.c.l.b16 %v269
    %v872 = vunpack.c.h.b16 %v269
    %v873 = vunpack.c.l.b16 %v270
    %v874 = vunpack.c.h.b16 %v270
    %v875 = vunpack.c.l.b16 %v271
    %v876 = vunpack.c.h.b16 %v271
    %v877 = vunpack.c.l.b16 %v272
    %v878 = vunpack.c.h.b16 %v272
    %v879 = vunpack.c.l.b16 %v273
    %v880 = vunpack.c.h.b16 %v273
    %v881 = vunpack.c.l.b16 %v274
    %v882 = vunpack.c.h.b16 %v274
    %v883 = vunpack.c.l.b16 %v275
    %v884 = vunpack.c.h.b16 %v275
    %v885 = vunpack.c.l.b16 %v276
    %v886 = vunpack.c.h.b16 %v276
    %v887 = vpack.c.b16 %v499, %v495
    %v888 = vpack.c.b16 %v500, %v496
    %v889 = vpack.c.b16 %v501, %v497
    %v890 = vpack.c.b16 %v502, %v498
    %v891 = vpack.c.b16 %v507, %v503
    %v892 = vpack.c.b16 %v508, %v504
    %v893 = vpack.c.b16 %v509, %v505
    %v894 = vpack.c.b16 %v510, %v506
    %v895 = vpack.c.b16 %v515, %v511
    %v896 = vpack.c.b16 %v516, %v512
    %v897 = vpack.c.b16 %v517, %v513
    %v898 = vpack.c.b16 %v518, %v514
    %v899 = vpack.c.b16 %v523, %v519
    %v900 = vpack.c.b16 %v524, %v520
    %v901 = vpack.c.b16 %v525, %v521
    %v902 = vpack.c.b16 %v526, %v522
    %v903 = vpack.c.b16 %v531, %v527
    %v904 = vpack.c.b16 %v532, %v528
    %v905 = vpack.c.b16 %v533, %v529
    %v906 = vpack.c.b16 %v534, %v530
    %v907 = vpack.c.b16 %v539, %v535
    %v908 = vpack.c.b16 %v540, %v536
    %v909 = vpack.c.b16 %v541, %v537
    %v910 = vpack.c.b16 %v542, %v538
    %v911 = vpack.c.b16 %v547, %v543
    %v912 = vpack.c.b16 %v548, %v544
    %v913 = vpack.c.b16 %v549, %v545
    %v914 = vpack.c.b16 %v550, %v546
    %v915 = vpack.c.b16 %v555, %v551
    %v916 = vpack.c.b16 %v556, %v552
    %v917 = vpack.c.b16 %v557, %v553
    %v918 = vpack.c.b16 %v558, %v554
    %v919 = vpack.c.b16 %v563, %v559
    %v920 = vpack.c.b16 %v564, %v560
    %v921 = vpack.c.b16 %v565, %v561
    %v922 = vpack.c.b16 %v566, %v562
    %v923 = vpack.c.b16 %v571, %v567
    %v924 = vpack.c.b16 %v572, %v568
    %v925 = vpack.c.b16 %v573, %v569
    %v926 = vpack.c.b16 %v574, %v570
    %v927 = vpack.c.b16 %v579, %v575
    %v928 = vpack.c.b16 %v580, %v576
    %v929 = vpack.c.b16 %v581, %v577
    %v930 = vpack.c.b16 %v582, %v578
    %v931 = vpack.c.b16 %v587, %v583
    %v932 = vpack.c.b16 %v588, %v584
    %v933 = vpack.c.b16 %v589, %v585
    %v934 = vpack.c.b16 %v590, %v586
    %v935 = vpack.c.b16 %v595, %v591
    %v936 = vpack.c.b16 %v596, %v592
    %v937 = vpack.c.b16 %v597, %v593
    %v938 = vpack.c.b16 %v598, %v594
    %v939 = vpack.c.b16 %v603, %v599
    %v940 = vpack.c.b16 %v604, %v600
    %v941 = vpack.c.b16 %v605, %v601
    %v942 = vpack.c.b16 %v606, %v602
    %v943 = vpack.c.b16 %v611, %v607
    %v944 = vpack.c.b16 %v612, %v608
    %v945 = vpack.c.b16 %v613, %v609
    %v946 = vpack.c.b16 %v614, %v610
    %v947 = vpack.c.b16 %v619, %v615
    %v948 = vpack.c.b16 %v620, %v616
    %v949 = vpack.c.b16 %v621, %v617
    %v950 = vpack.c.b16 %v622, %v618
    %v951 = vpack.c.b16 %v627, %v623
    %v952 = vpack.c.b16 %v628, %v624
    %v953 = vpack.c.b16 %v629, %v625
    %v954 = vpack.c.b16 %v630, %v626
    %v955 = vpack.c.b16 %v635, %v631
    %v956 = vpack.c.b16 %v636, %v632
    %v957 = vpack.c.b16 %v637, %v633
    %v958 = vpack.c.b16 %v638, %v634
    %v959 = vpack.c.b16 %v643, %v639
    %v960 = vpack.c.b16 %v644, %v640
    %v961 = vpack.c.b16 %v645, %v641
    %v962 = vpack.c.b16 %v646, %v642
    %v963 = vpack.c.b16 %v651, %v647
    %v964 = vpack.c.b16 %v652, %v648
    %v965 = vpack.c.b16 %v653, %v649
    %v966 = vpack.c.b16 %v654, %v650
    %v967 = vpack.c.b16 %v659, %v655
    %v968 = vpack.c.b16 %v660, %v656
    %v969 = vpack.c.b16 %v661, %v657
    %v970 = vpack.c.b16 %v662, %v658
    %v971 = vpack.c.b16 %v667, %v663
    %v972 = vpack.c.b16 %v668, %v664
    %v973 = vpack.c.b16 %v669, %v665
    %v974 = vpack.c.b16 %v670, %v666
    %v975 = vpack.c.b16 %v675, %v671
    %v976 = vpack.c.b16 %v676, %v672
    %v977 = vpack.c.b16 %v677, %v673
    %v978 = vpack.c.b16 %v678, %v674
    %v979 = vpack.c.b16 %v683, %v679
    %v980 = vpack.c.b16 %v684, %v680
    %v981 = vpack.c.b16 %v685, %v681
    %v982 = vpack.c.b16 %v686, %v682
    %v983 = vpack.c.b16 %v691, %v687
    %v984 = vpack.c.b16 %v692, %v688
    %v985 = vpack.c.b16 %v693, %v689
    %v986 = vpack.c.b16 %v694, %v690
    %v987 = vpack.c.b16 %v699, %v695
    %v988 = vpack.c.b16 %v700, %v696
    %v989 = vpack.c.b16 %v701, %v697
    %v990 = vpack.c.b16 %v702, %v698
    %v991 = vpack.c.b16 %v707, %v703
    %v992 = vpack.c.b16 %v708, %v704
    %v993 = vpack.c.b16 %v709, %v705
    %v994 = vpack.c.b16 %v710, %v706
    %v995 = vpack.c.b16 %v715, %v711
    %v996 = vpack.c.b16 %v716, %v712
    %v997 = vpack.c.b16 %v717, %v713
    %v998 = vpack.c.b16 %v718, %v714
    %v999 = vpack.c.b16 %v723, %v719
    %v1000 = vpack.c.b16 %v724, %v720
    %v1001 = vpack.c.b16 %v725, %v721
    %v1002 = vpack.c.b16 %v726, %v722
    %v1003 = vpack.c.b16 %v731, %v727
    %v1004 = vpack.c.b16 %v732, %v728
    %v1005 = vpack.c.b16 %v733, %v729
    %v1006 = vpack.c.b16 %v734, %v730
    %v1007 = vpack.c.b16 %v739, %v735
    %v1008 = vpack.c.b16 %v740, %v736
    %v1009 = vpack.c.b16 %v741, %v737
    %v1010 = vpack.c.b16 %v742, %v738
    %v1011 = vpack.c.b16 %v747, %v743
    %v1012 = vpack.c.b16 %v748, %v744
    %v1013 = vpack.c.b16 %v749, %v745
    %v1014 = vpack.c.b16 %v750, %v746
    %v1015 = vpack.c.b16 %v755, %v751
    %v1016 = vpack.c.b16 %v756, %v752
    %v1017 = vpack.c.b16 %v757, %v753
    %v1018 = vpack.c.b16 %v758, %v754
    %v1019 = vpack.c.b16 %v763, %v759
    %v1020 = vpack.c.b16 %v764, %v760
    %v1021 = vpack.c.b16 %v765, %v761
    %v1022 = vpack.c.b16 %v766, %v762
    %v1023 = vpack.c.b16 %v771, %v767
    %v1024 = vpack.c.b16 %v772, %v768
    %v1025 = vpack.c.b16 %v773, %v769
    %v1026 = vpack.c.b16 %v774, %v770
    %v1027 = vpack.c.b16 %v779, %v775
    %v1028 = vpack.c.b16 %v780, %v776
    %v1029 = vpack.c.b16 %v781, %v777
    %v1030 = vpack.c.b16 %v782, %v778
    %v1031 = vpack.c.b16 %v787, %v783
    %v1032 = vpack.c.b16 %v788, %v784
    %v1033 = vpack.c.b16 %v789, %v785
    %v1034 = vpack.c.b16 %v790, %v786
    %v1035 = vpack.c.b16 %v795, %v791
    %v1036 = vpack.c.b16 %v796, %v792
    %v1037 = vpack.c.b16 %v797, %v793
    %v1038 = vpack.c.b16 %v798, %v794
    %v1039 = vpack.c.b16 %v803, %v799
    %v1040 = vpack.c.b16 %v804, %v800
    %v1041 = vpack.c.b16 %v805, %v801
    %v1042 = vpack.c.b16 %v806, %v802
    %v1043 = vpack.c.b16 %v811, %v807
    %v1044 = vpack.c.b16 %v812, %v808
    %v1045 = vpack.c.b16 %v813, %v809
    %v1046 = vpack.c.b16 %v814, %v810
    %v1047 = vpack.c.b16 %v819, %v815
    %v1048 = vpack.c.b16 %v820, %v816
    %v1049 = vpack.c.b16 %v821, %v817
    %v1050 = vpack.c.b16 %v822, %v818
    %v1051 = vpack.c.b16 %v827, %v823
    %v1052 = vpack.c.b16 %v828, %v824
    %v1053 = vpack.c.b16 %v829, %v825
    %v1054 = vpack.c.b16 %v830, %v826
    %v1055 = vpack.c.b16 %v835, %v831
    %v1056 = vpack.c.b16 %v836, %v832
    %v1057 = vpack.c.b16 %v837, %v833
    %v1058 = vpack.c.b16 %v838, %v834
    %v1059 = vpack.c.b16 %v843, %v839
    %v1060 = vpack.c.b16 %v844, %v840
    %v1061 = vpack.c.b16 %v845, %v841
    %v1062 = vpack.c.b16 %v846, %v842
    %v1063 = vpack.c.b16 %v851, %v847
    %v1064 = vpack.c.b16 %v852, %v848
    %v1065 = vpack.c.b16 %v853, %v849
    %v1066 = vpack.c.b16 %v854, %v850
    %v1067 = vpack.c.b16 %v859, %v855
    %v1068 = vpack.c.b16 %v860, %v856
    %v1069 = vpack.c.b16 %v861, %v857
    %v1070 = vpack.c.b16 %v862, %v858
    %v1071 = vpack.c.b16 %v867, %v863
    %v1072 = vpack.c.b16 %v868, %v864
    %v1073 = vpack.c.b16 %v869, %v865
    %v1074 = vpack.c.b16 %v870, %v866
    %v1075 = vpack.c.b16 %v875, %v871
    %v1076 = vpack.c.b16 %v876, %v872
    %v1077 = vpack.c.b16 %v877, %v873
    %v1078 = vpack.c.b16 %v878, %v874
    %v1079 = vpack.c.b16 %v883, %v879
    %v1080 = vpack.c.b16 %v884, %v880
    %v1081 = vpack.c.b16 %v885, %v881
    %v1082 = vpack.c.b16 %v886, %v882
    %vm1279 = vcmask 130048
    %v1281 = vsel %vm1279, %v80, 0
    %1283 = vmatprep.subr.bf16.mxu0 %v888
    %1284 = vmatpush1.bf16.msra.mxu0 %v887
    %1285 = vmatprep.subr.bf16.mxu0 %v892
    %1286 = vmatpush1.bf16.msra.mxu0 %v891
    %1287 = vmatprep.subr.bf16.mxu0 %v896
    %1288 = vmatpush1.bf16.msra.mxu0 %v895
    %1289 = vmatprep.subr.bf16.mxu0 %v900
    %1290 = vmatpush1.bf16.msra.mxu0 %v899
    %1291 = vmatprep.subr.bf16.mxu0 %v904
    %1292 = vmatpush1.bf16.msra.mxu0 %v903
    %1293 = vmatprep.subr.bf16.mxu0 %v908
    %1294 = vmatpush1.bf16.msra.mxu0 %v907
    %1295 = vmatprep.subr.bf16.mxu0 %v912
    %1296 = vmatpush1.bf16.msra.mxu0 %v911
    %1297 = vmatprep.subr.bf16.mxu0 %v916
    %1298 = vmatpush1.bf16.msra.mxu0 %v915
    %1299 = vmatprep.subr.bf16.mxu0 %v920
    %1300 = vmatpush1.bf16.msra.mxu0 %v919
    %1301 = vmatprep.subr.bf16.mxu0 %v924
    %1302 = vmatpush1.bf16.msra.mxu0 %v923
    %1303 = vmatprep.subr.bf16.mxu0 %v928
    %1304 = vmatpush1.bf16.msra.mxu0 %v927
    %1305 = vmatprep.subr.bf16.mxu0 %v932
    %1306 = vmatpush1.bf16.msra.mxu0 %v931
    %1307 = vmatprep.subr.bf16.mxu0 %v936
    %1308 = vmatpush1.bf16.msra.mxu0 %v935
    %1309 = vmatprep.subr.bf16.mxu0 %v940
    %1310 = vmatpush1.bf16.msra.mxu0 %v939
    %1311 = vmatprep.subr.bf16.mxu0 %v944
    %1312 = vmatpush1.bf16.msra.mxu0 %v943
    %1313 = vmatprep.subr.bf16.mxu0 %v948
    %1314 = vmatpush1.bf16.msra.mxu0 %v947
    %1315 = vmatprep.mubr.bf16.mxu0 %v75
    %1316 = vmatmul.mubr.bf16.gmra.mrb[0].mxu0 %v74
    %v1317 = vpop.f32.mrb[0].mxu0
    %v1318 = vadd.f32 %v282, %v1317
    %v1319 = vpop.f32.mrb[0].mxu0
    %v1320 = vadd.f32 %v286, %v1319
    %v1321 = vpop.f32.mrb[0].mxu0
    %v1322 = vpop.f32.mrb[0].mxu0
    %1323 = vdwg.mxu0
    %1324 = vmatprep.subr.bf16.mxu0 %v952
    %1325 = vmatpush1.bf16.msra.mxu0 %v951
    %1326 = vmatprep.subr.bf16.mxu0 %v956
    %1327 = vmatpush1.bf16.msra.mxu0 %v955
    %1328 = vmatprep.subr.bf16.mxu0 %v960
    %1329 = vmatpush1.bf16.msra.mxu0 %v959
    %1330 = vmatprep.subr.bf16.mxu0 %v964
    %1331 = vmatpush1.bf16.msra.mxu0 %v963
    %1332 = vmatprep.subr.bf16.mxu0 %v968
    %1333 = vmatpush1.bf16.msra.mxu0 %v967
    %1334 = vmatprep.subr.bf16.mxu0 %v972
    %1335 = vmatpush1.bf16.msra.mxu0 %v971
    %1336 = vmatprep.subr.bf16.mxu0 %v976
    %1337 = vmatpush1.bf16.msra.mxu0 %v975
    %1338 = vmatprep.subr.bf16.mxu0 %v980
    %1339 = vmatpush1.bf16.msra.mxu0 %v979
    %1340 = vmatprep.subr.bf16.mxu0 %v984
    %1341 = vmatpush1.bf16.msra.mxu0 %v983
    %1342 = vmatprep.subr.bf16.mxu0 %v988
    %1343 = vmatpush1.bf16.msra.mxu0 %v987
    %1344 = vmatprep.subr.bf16.mxu0 %v992
    %1345 = vmatpush1.bf16.msra.mxu0 %v991
    %1346 = vmatprep.subr.bf16.mxu0 %v996
    %1347 = vmatpush1.bf16.msra.mxu0 %v995
    %1348 = vmatprep.subr.bf16.mxu0 %v1000
    %1349 = vmatpush1.bf16.msra.mxu0 %v999
    %1350 = vmatprep.subr.bf16.mxu0 %v1004
    %1351 = vmatpush1.bf16.msra.mxu0 %v1003
    %1352 = vmatprep.subr.bf16.mxu0 %v1008
    %1353 = vmatpush1.bf16.msra.mxu0 %v1007
    %1354 = vmatprep.subr.bf16.mxu0 %v1012
    %1355 = vmatpush1.bf16.msra.mxu0 %v1011
    %1356 = vmatprep.mubr.bf16.mxu0 %v77
    %1357 = vmatmul.mubr.bf16.gmra.mrb[0].mxu0 %v76
    %v1358 = vpop.f32.mrb[0].mxu0
    %v1359 = vadd.f32 %v1318, %v1358
    %v1360 = vpop.f32.mrb[0].mxu0
    %v1361 = vadd.f32 %v1320, %v1360
    %v1362 = vpop.f32.mrb[0].mxu0
    %v1363 = vpop.f32.mrb[0].mxu0
    %1364 = vdwg.mxu0
    %1365 = vmatprep.subr.bf16.mxu0 %v1016
    %1366 = vmatpush1.bf16.msra.mxu0 %v1015
    %1367 = vmatprep.subr.bf16.mxu0 %v1020
    %1368 = vmatpush1.bf16.msra.mxu0 %v1019
    %1369 = vmatprep.subr.bf16.mxu0 %v1024
    %1370 = vmatpush1.bf16.msra.mxu0 %v1023
    %1371 = vmatprep.subr.bf16.mxu0 %v1028
    %1372 = vmatpush1.bf16.msra.mxu0 %v1027
    %1373 = vmatprep.subr.bf16.mxu0 %v1032
    %1374 = vmatpush1.bf16.msra.mxu0 %v1031
    %1375 = vmatprep.subr.bf16.mxu0 %v1036
    %1376 = vmatpush1.bf16.msra.mxu0 %v1035
    %1377 = vmatprep.subr.bf16.mxu0 %v1040
    %1378 = vmatpush1.bf16.msra.mxu0 %v1039
    %1379 = vmatprep.subr.bf16.mxu0 %v1044
    %1380 = vmatpush1.bf16.msra.mxu0 %v1043
    %1381 = vmatprep.subr.bf16.mxu0 %v1048
    %1382 = vmatpush1.bf16.msra.mxu0 %v1047
    %1383 = vmatprep.subr.bf16.mxu0 %v1052
    %1384 = vmatpush1.bf16.msra.mxu0 %v1051
    %1385 = vmatprep.subr.bf16.mxu0 %v1056
    %1386 = vmatpush1.bf16.msra.mxu0 %v1055
    %1387 = vmatprep.subr.bf16.mxu0 %v1060
    %1388 = vmatpush1.bf16.msra.mxu0 %v1059
    %1389 = vmatprep.subr.bf16.mxu0 %v1064
    %1390 = vmatpush1.bf16.msra.mxu0 %v1063
    %1391 = vmatprep.subr.bf16.mxu0 %v1068
    %1392 = vmatpush1.bf16.msra.mxu0 %v1067
    %1393 = vmatprep.subr.bf16.mxu0 %v1072
    %1394 = vmatpush1.bf16.msra.mxu0 %v1071
    %1395 = vmatprep.subr.bf16.mxu0 %v1076
    %1396 = vmatpush1.bf16.msra.mxu0 %v1075
    %1397 = vmatprep.mubr.bf16.mxu0 %v79
    %1398 = vmatmul.mubr.bf16.gmra.mrb[0].mxu0 %v78
    %v1399 = vpop.f32.mrb[0].mxu0
    %v1400 = vadd.f32 %v1359, %v1399
    %v1401 = vpop.f32.mrb[0].mxu0
    %v1402 = vadd.f32 %v1361, %v1401
    %v1403 = vpop.f32.mrb[0].mxu0
    %v1404 = vpop.f32.mrb[0].mxu0
    %1405 = vdwg.mxu0
    %1406 = vmatprep.subr.bf16.mxu0 %v1080
    %1407 = vmatpush1.bf16.msra.mxu0 %v1079
    %1408 = vmatprep.subr.bf16.mxu0 0
    %1409 = vmatpush1.bf16.msra.mxu0 0
    %1410 = vmatprep.subr.bf16.mxu0 0
    %1411 = vmatpush1.bf16.msra.mxu0 0
    %1412 = vmatprep.subr.bf16.mxu0 0
    %1413 = vmatpush1.bf16.msra.mxu0 0
    %1414 = vmatprep.subr.bf16.mxu0 0
    %1415 = vmatpush1.bf16.msra.mxu0 0
    %1416 = vmatprep.subr.bf16.mxu0 0
    %1417 = vmatpush1.bf16.msra.mxu0 0
    %1418 = vmatprep.subr.bf16.mxu0 0
    %1419 = vmatpush1.bf16.msra.mxu0 0
    %1420 = vmatprep.subr.bf16.mxu0 0
    %1421 = vmatpush1.bf16.msra.mxu0 0
    %1422 = vmatprep.subr.bf16.mxu0 0
    %1423 = vmatpush1.bf16.msra.mxu0 0
    %1424 = vmatprep.subr.bf16.mxu0 0
    %1425 = vmatpush1.bf16.msra.mxu0 0
    %1426 = vmatprep.subr.bf16.mxu0 0
    %1427 = vmatpush1.bf16.msra.mxu0 0
    %1428 = vmatprep.subr.bf16.mxu0 0
    %1429 = vmatpush1.bf16.msra.mxu0 0
    %1430 = vmatprep.subr.bf16.mxu0 0
    %1431 = vmatpush1.bf16.msra.mxu0 0
    %1432 = vmatprep.subr.bf16.mxu0 0
    %1433 = vmatpush1.bf16.msra.mxu0 0
    %1434 = vmatprep.subr.bf16.mxu0 0
    %1435 = vmatpush1.bf16.msra.mxu0 0
    %1436 = vmatprep.subr.bf16.mxu0 0
    %1437 = vmatpush1.bf16.msra.mxu0 0
    %1438 = vmatprep.mubr.bf16.mxu0 0
    %1439 = vmatmul.mubr.bf16.gmra.mrb[0].mxu0 %v1281
    %v1440 = vpop.f32.mrb[0].mxu0
    %v1441 = vadd.f32 %v1400, %v1440
    %v1442 = vpop.f32.mrb[0].mxu0
    %v1443 = vadd.f32 %v1402, %v1442
    %v1444 = vpop.f32.mrb[0].mxu0
    %v1445 = vpop.f32.mrb[0].mxu0
    %1446 = vdwg.mxu0
    %1447 = vmatprep.subr.bf16.mxu0 %v890
    %1448 = vmatpush1.bf16.msra.mxu0 %v889
    %1449 = vmatprep.subr.bf16.mxu0 %v894
    %1450 = vmatpush1.bf16.msra.mxu0 %v893
    %1451 = vmatprep.subr.bf16.mxu0 %v898
    %1452 = vmatpush1.bf16.msra.mxu0 %v897
    %1453 = vmatprep.subr.bf16.mxu0 %v902
    %1454 = vmatpush1.bf16.msra.mxu0 %v901
    %1455 = vmatprep.subr.bf16.mxu0 %v906
    %1456 = vmatpush1.bf16.msra.mxu0 %v905
    %1457 = vmatprep.subr.bf16.mxu0 %v910
    %1458 = vmatpush1.bf16.msra.mxu0 %v909
    %1459 = vmatprep.subr.bf16.mxu0 %v914
    %1460 = vmatpush1.bf16.msra.mxu0 %v913
    %1461 = vmatprep.subr.bf16.mxu0 %v918
    %1462 = vmatpush1.bf16.msra.mxu0 %v917
    %1463 = vmatprep.subr.bf16.mxu0 %v922
    %1464 = vmatpush1.bf16.msra.mxu0 %v921
    %1465 = vmatprep.subr.bf16.mxu0 %v926
    %1466 = vmatpush1.bf16.msra.mxu0 %v925
    %1467 = vmatprep.subr.bf16.mxu0 %v930
    %1468 = vmatpush1.bf16.msra.mxu0 %v929
    %1469 = vmatprep.subr.bf16.mxu0 %v934
    %1470 = vmatpush1.bf16.msra.mxu0 %v933
    %1471 = vmatprep.subr.bf16.mxu0 %v938
    %1472 = vmatpush1.bf16.msra.mxu0 %v937
    %1473 = vmatprep.subr.bf16.mxu0 %v942
    %1474 = vmatpush1.bf16.msra.mxu0 %v941
    %1475 = vmatprep.subr.bf16.mxu0 %v946
    %1476 = vmatpush1.bf16.msra.mxu0 %v945
    %1477 = vmatprep.subr.bf16.mxu0 %v950
    %1478 = vmatpush1.bf16.msra.mxu0 %v949
    %1479 = vmatprep.mubr.bf16.mxu0 %v75
    %1480 = vmatmul.mubr.bf16.gmra.mrb[0].mxu0 %v74
    %v1481 = vpop.f32.mrb[0].mxu0
    %v1482 = vadd.f32 %v290, %v1481
    %v1483 = vpop.f32.mrb[0].mxu0
    %v1484 = vadd.f32 %v294, %v1483
    %v1485 = vpop.f32.mrb[0].mxu0
    %v1486 = vpop.f32.mrb[0].mxu0
    %1487 = vdwg.mxu0
    %1488 = vmatprep.subr.bf16.mxu0 %v954
    %1489 = vmatpush1.bf16.msra.mxu0 %v953
    %1490 = vmatprep.subr.bf16.mxu0 %v958
    %1491 = vmatpush1.bf16.msra.mxu0 %v957
    %1492 = vmatprep.subr.bf16.mxu0 %v962
    %1493 = vmatpush1.bf16.msra.mxu0 %v961
    %1494 = vmatprep.subr.bf16.mxu0 %v966
    %1495 = vmatpush1.bf16.msra.mxu0 %v965
    %1496 = vmatprep.subr.bf16.mxu0 %v970
    %1497 = vmatpush1.bf16.msra.mxu0 %v969
    %1498 = vmatprep.subr.bf16.mxu0 %v974
    %1499 = vmatpush1.bf16.msra.mxu0 %v973
    %1500 = vmatprep.subr.bf16.mxu0 %v978
    %1501 = vmatpush1.bf16.msra.mxu0 %v977
    %1502 = vmatprep.subr.bf16.mxu0 %v982
    %1503 = vmatpush1.bf16.msra.mxu0 %v981
    %1504 = vmatprep.subr.bf16.mxu0 %v986
    %1505 = vmatpush1.bf16.msra.mxu0 %v985
    %1506 = vmatprep.subr.bf16.mxu0 %v990
    %1507 = vmatpush1.bf16.msra.mxu0 %v989
    %1508 = vmatprep.subr.bf16.mxu0 %v994
    %1509 = vmatpush1.bf16.msra.mxu0 %v993
    %1510 = vmatprep.subr.bf16.mxu0 %v998
    %1511 = vmatpush1.bf16.msra.mxu0 %v997
    %1512 = vmatprep.subr.bf16.mxu0 %v1002
    %1513 = vmatpush1.bf16.msra.mxu0 %v1001
    %1514 = vmatprep.subr.bf16.mxu0 %v1006
    %1515 = vmatpush1.bf16.msra.mxu0 %v1005
    %1516 = vmatprep.subr.bf16.mxu0 %v1010
    %1517 = vmatpush1.bf16.msra.mxu0 %v1009
    %1518 = vmatprep.subr.bf16.mxu0 %v1014
    %1519 = vmatpush1.bf16.msra.mxu0 %v1013
    %1520 = vmatprep.mubr.bf16.mxu0 %v77
    %1521 = vmatmul.mubr.bf16.gmra.mrb[0].mxu0 %v76
    %v1522 = vpop.f32.mrb[0].mxu0
    %v1523 = vadd.f32 %v1482, %v1522
    %v1524 = vpop.f32.mrb[0].mxu0
    %v1525 = vadd.f32 %v1484, %v1524
    %v1526 = vpop.f32.mrb[0].mxu0
    %v1527 = vpop.f32.mrb[0].mxu0
    %1528 = vdwg.mxu0
    %1529 = vmatprep.subr.bf16.mxu0 %v1018
    %1530 = vmatpush1.bf16.msra.mxu0 %v1017
    %1531 = vmatprep.subr.bf16.mxu0 %v1022
    %1532 = vmatpush1.bf16.msra.mxu0 %v1021
    %1533 = vmatprep.subr.bf16.mxu0 %v1026
    %1534 = vmatpush1.bf16.msra.mxu0 %v1025
    %1535 = vmatprep.subr.bf16.mxu0 %v1030
    %1536 = vmatpush1.bf16.msra.mxu0 %v1029
    %1537 = vmatprep.subr.bf16.mxu0 %v1034
    %1538 = vmatpush1.bf16.msra.mxu0 %v1033
    %1539 = vmatprep.subr.bf16.mxu0 %v1038
    %1540 = vmatpush1.bf16.msra.mxu0 %v1037
    %1541 = vmatprep.subr.bf16.mxu0 %v1042
    %1542 = vmatpush1.bf16.msra.mxu0 %v1041
    %1543 = vmatprep.subr.bf16.mxu0 %v1046
    %1544 = vmatpush1.bf16.msra.mxu0 %v1045
    %1545 = vmatprep.subr.bf16.mxu0 %v1050
    %1546 = vmatpush1.bf16.msra.mxu0 %v1049
    %1547 = vmatprep.subr.bf16.mxu0 %v1054
    %1548 = vmatpush1.bf16.msra.mxu0 %v1053
    %1549 = vmatprep.subr.bf16.mxu0 %v1058
    %1550 = vmatpush1.bf16.msra.mxu0 %v1057
    %1551 = vmatprep.subr.bf16.mxu0 %v1062
    %1552 = vmatpush1.bf16.msra.mxu0 %v1061
    %1553 = vmatprep.subr.bf16.mxu0 %v1066
    %1554 = vmatpush1.bf16.msra.mxu0 %v1065
    %1555 = vmatprep.subr.bf16.mxu0 %v1070
    %1556 = vmatpush1.bf16.msra.mxu0 %v1069
    %1557 = vmatprep.subr.bf16.mxu0 %v1074
    %1558 = vmatpush1.bf16.msra.mxu0 %v1073
    %1559 = vmatprep.subr.bf16.mxu0 %v1078
    %1560 = vmatpush1.bf16.msra.mxu0 %v1077
    %1561 = vmatprep.mubr.bf16.mxu0 %v79
    %1562 = vmatmul.mubr.bf16.gmra.mrb[0].mxu0 %v78
    %v1563 = vpop.f32.mrb[0].mxu0
    %v1564 = vadd.f32 %v1523, %v1563
    %v1565 = vpop.f32.mrb[0].mxu0
    %v1566 = vadd.f32 %v1525, %v1565
    %v1567 = vpop.f32.mrb[0].mxu0
    %v1568 = vpop.f32.mrb[0].mxu0
    %1569 = vdwg.mxu0
    %1570 = vmatprep.subr.bf16.mxu0 %v1082
    %1571 = vmatpush1.bf16.msra.mxu0 %v1081
    %1572 = vmatprep.subr.bf16.mxu0 0
    %1573 = vmatpush1.bf16.msra.mxu0 0
    %1574 = vmatprep.subr.bf16.mxu0 0
    %1575 = vmatpush1.bf16.msra.mxu0 0
    %1576 = vmatprep.subr.bf16.mxu0 0
    %1577 = vmatpush1.bf16.msra.mxu0 0
    %1578 = vmatprep.subr.bf16.mxu0 0
    %1579 = vmatpush1.bf16.msra.mxu0 0
    %1580 = vmatprep.subr.bf16.mxu0 0
    %1581 = vmatpush1.bf16.msra.mxu0 0
    %1582 = vmatprep.subr.bf16.mxu0 0
    %1583 = vmatpush1.bf16.msra.mxu0 0
    %1584 = vmatprep.subr.bf16.mxu0 0
    %1585 = vmatpush1.bf16.msra.mxu0 0
    %1586 = vmatprep.subr.bf16.mxu0 0
    %1587 = vmatpush1.bf16.msra.mxu0 0
    %1588 = vmatprep.subr.bf16.mxu0 0
    %1589 = vmatpush1.bf16.msra.mxu0 0
    %1590 = vmatprep.subr.bf16.mxu0 0
    %1591 = vmatpush1.bf16.msra.mxu0 0
    %1592 = vmatprep.subr.bf16.mxu0 0
    %1593 = vmatpush1.bf16.msra.mxu0 0
    %1594 = vmatprep.subr.bf16.mxu0 0
    %1595 = vmatpush1.bf16.msra.mxu0 0
    %1596 = vmatprep.subr.bf16.mxu0 0
    %1597 = vmatpush1.bf16.msra.mxu0 0
    %1598 = vmatprep.subr.bf16.mxu0 0
    %1599 = vmatpush1.bf16.msra.mxu0 0
    %1600 = vmatprep.subr.bf16.mxu0 0
    %1601 = vmatpush1.bf16.msra.mxu0 0
    %1602 = vmatprep.mubr.bf16.mxu0 0
    %1603 = vmatmul.mubr.bf16.gmra.mrb[0].mxu0 %v1281
    %v1604 = vpop.f32.mrb[0].mxu0
    %v1605 = vadd.f32 %v1564, %v1604
    %v1606 = vpop.f32.mrb[0].mxu0
    %v1607 = vadd.f32 %v1566, %v1606
    %v1608 = vpop.f32.mrb[0].mxu0
    %v1609 = vpop.f32.mrb[0].mxu0
    %1610 = vdwg.mxu0
    %v1611 = vadd.f32 %v1441, %v1443
    %v1612 = vadd.f32 %v1611, %v1605
    %v1613 = vadd.f32 %v1612, %v1607
    %1614 = vadd.xlane.f32.xlu0 %v1613
    %v1615 = vpop.xlane.xlu0 %1614
    %v1616 = vmul.f32 %v1615, 0.001953125
    %v1617 = vmul.f32 %v1441, %v1441
    %v1618 = vmul.f32 %v1443, %v1443
    %v1619 = vmul.f32 %v1605, %v1605
    %v1620 = vmul.f32 %v1607, %v1607
    %v1621 = vadd.f32 %v1617, %v1618
    %v1622 = vadd.f32 %v1621, %v1619
    %v1623 = vadd.f32 %v1622, %v1620
    %1624 = vadd.xlane.f32.xlu0 %v1623
    %v1625 = vpop.xlane.xlu0 %1624
    %v1626 = vmul.f32 %v1625, 0.001953125
    %v1627 = vmul.f32 %v1616, %v1616
    %v1628 = vsub.f32 %v1626, %v1627
    %v1629 = vadd.f32 %v1628, 1e-05
    %v1630 = vrsqrt.pop %v1629
    %v1631 = vsub.f32 %v1441, %v1616
    %v1632 = vsub.f32 %v1443, %v1616
    %v1633 = vsub.f32 %v1605, %v1616
    %v1634 = vsub.f32 %v1607, %v1616
    %v1635 = vmul.f32 %v1631, %v1630
    %v1636 = vmul.f32 %v1632, %v1630
    %v1637 = vmul.f32 %v1633, %v1630
    %v1638 = vmul.f32 %v1634, %v1630
    %v1639 = vld [vmem:[%s3] sm:$0xf]
    %v1641 = vlaneseq
    %v1642 = vshrl.u32 %v1641, 7
    %v1643 = vsub.s32 0, %v1642
    %v1644 = vrot.slane %v1639, %v1643
    %v1645 = vlaneseq
    %v1646 = vshrl.u32 %v1645, 7
    %v1647 = vsub.s32 1, %v1646
    %v1648 = vrot.slane %v1639, %v1647
    %v1649 = vlaneseq
    %v1650 = vshrl.u32 %v1649, 7
    %v1651 = vsub.s32 2, %v1650
    %v1652 = vrot.slane %v1639, %v1651
    %v1653 = vlaneseq
    %v1654 = vshrl.u32 %v1653, 7
    %v1655 = vsub.s32 3, %v1654
    %v1656 = vrot.slane %v1639, %v1655
    %v1661 = vmul.f32 %v1635, %v1644
    %v1662 = vmul.f32 %v1636, %v1648
    %v1663 = vmul.f32 %v1637, %v1652
    %v1664 = vmul.f32 %v1638, %v1656
    %v1665 = vld [vmem:[%s4] sm:$0xf]
    %v1667 = vlaneseq
    %v1668 = vshrl.u32 %v1667, 7
    %v1669 = vsub.s32 0, %v1668
    %v1670 = vrot.slane %v1665, %v1669
    %v1671 = vlaneseq
    %v1672 = vshrl.u32 %v1671, 7
    %v1673 = vsub.s32 1, %v1672
    %v1674 = vrot.slane %v1665, %v1673
    %v1675 = vlaneseq
    %v1676 = vshrl.u32 %v1675, 7
    %v1677 = vsub.s32 2, %v1676
    %v1678 = vrot.slane %v1665, %v1677
    %v1679 = vlaneseq
    %v1680 = vshrl.u32 %v1679, 7
    %v1681 = vsub.s32 3, %v1680
    %v1682 = vrot.slane %v1665, %v1681
    %v1687 = vadd.f32 %v1661, %v1670
    %v1688 = vadd.f32 %v1662, %v1674
    %v1689 = vadd.f32 %v1663, %v1678
    %v1690 = vadd.f32 %v1664, %v1682
    %v1691 = vmax.f32 %v1687, 0.0
    %v1692 = vmax.f32 %v1688, 0.0
    %v1693 = vmax.f32 %v1689, 0.0
    %v1694 = vmax.f32 %v1690, 0.0
    %v1695 = vpack.c.bf16 %v1691, %v1691
    %v1696 = vpack.c.bf16 %v1692, %v1692
    %v1697 = vpack.c.bf16 %v1693, %v1693
    %v1698 = vpack.c.bf16 %v1694, %v1694
    %v1699 = vld [vmem:[#allocation4] sm:$0xff]
    %v1700 = vld [vmem:[#allocation4 + $0x8] sm:$0xff]
    %v1701 = vld [vmem:[#allocation4 + $0x10] sm:$0xff]
    %v1702 = vld [vmem:[#allocation4 + $0x18] sm:$0xff]
    %v1703 = vld [vmem:[#allocation4 + $0x20] sm:$0xff]
    %v1704 = vld [vmem:[#allocation4 + $0x28] sm:$0xff]
    %v1705 = vld [vmem:[#allocation4 + $0x30] sm:$0xff]
    %v1706 = vld [vmem:[#allocation4 + $0x38] sm:$0xff]
    %v1707 = vld [vmem:[#allocation4 + $0x40] sm:$0xff]
    %v1708 = vld [vmem:[#allocation4 + $0x48] sm:$0xff]
    %v1709 = vld [vmem:[#allocation4 + $0x50] sm:$0xff]
    %v1710 = vld [vmem:[#allocation4 + $0x58] sm:$0xff]
    %v1711 = vld [vmem:[#allocation4 + $0x60] sm:$0xff]
    %v1712 = vld [vmem:[#allocation4 + $0x68] sm:$0xff]
    %v1713 = vld [vmem:[#allocation4 + $0x70] sm:$0xff]
    %v1714 = vld [vmem:[#allocation4 + $0x78] sm:$0xff]
    %v1715 = vld [vmem:[#allocation4 + $0x80] sm:$0xff]
    %v1716 = vld [vmem:[#allocation4 + $0x88] sm:$0xff]
    %v1717 = vld [vmem:[#allocation4 + $0x90] sm:$0xff]
    %v1718 = vld [vmem:[#allocation4 + $0x98] sm:$0xff]
    %v1719 = vld [vmem:[#allocation4 + $0xa0] sm:$0xff]
    %v1720 = vld [vmem:[#allocation4 + $0xa8] sm:$0xff]
    %v1721 = vld [vmem:[#allocation4 + $0xb0] sm:$0xff]
    %v1722 = vld [vmem:[#allocation4 + $0xb8] sm:$0xff]
    %v1723 = vld [vmem:[#allocation4 + $0xc0] sm:$0xff]
    %v1724 = vld [vmem:[#allocation4 + $0xc8] sm:$0xff]
    %v1725 = vld [vmem:[#allocation4 + $0xd0] sm:$0xff]
    %v1726 = vld [vmem:[#allocation4 + $0xd8] sm:$0xff]
    %v1727 = vld [vmem:[#allocation4 + $0xe0] sm:$0xff]
    %v1728 = vld [vmem:[#allocation4 + $0xe8] sm:$0xff]
    %v1729 = vld [vmem:[#allocation4 + $0xf0] sm:$0xff]
    %v1730 = vld [vmem:[#allocation4 + $0xf8] sm:$0xff]
    %v1731 = vld [vmem:[#allocation4 + $0x100] sm:$0xff]
    %v1732 = vld [vmem:[#allocation4 + $0x108] sm:$0xff]
    %v1733 = vld [vmem:[#allocation4 + $0x110] sm:$0xff]
    %v1734 = vld [vmem:[#allocation4 + $0x118] sm:$0xff]
    %v1735 = vld [vmem:[#allocation4 + $0x120] sm:$0xff]
    %v1736 = vld [vmem:[#allocation4 + $0x128] sm:$0xff]
    %v1737 = vld [vmem:[#allocation4 + $0x130] sm:$0xff]
    %v1738 = vld [vmem:[#allocation4 + $0x138] sm:$0xff]
    %v1739 = vld [vmem:[#allocation4 + $0x140] sm:$0xff]
    %v1740 = vld [vmem:[#allocation4 + $0x148] sm:$0xff]
    %v1741 = vld [vmem:[#allocation4 + $0x150] sm:$0xff]
    %v1742 = vld [vmem:[#allocation4 + $0x158] sm:$0xff]
    %v1743 = vld [vmem:[#allocation4 + $0x160] sm:$0xff]
    %v1744 = vld [vmem:[#allocation4 + $0x168] sm:$0xff]
    %v1745 = vld [vmem:[#allocation4 + $0x170] sm:$0xff]
    %v1746 = vld [vmem:[#allocation4 + $0x178] sm:$0xff]
    %v1747 = vld [vmem:[#allocation4 + $0x180] sm:$0xff]
    %v1748 = vld [vmem:[#allocation4 + $0x188] sm:$0xff]
    %v1749 = vld [vmem:[#allocation4 + $0x190] sm:$0xff]
    %v1750 = vld [vmem:[#allocation4 + $0x198] sm:$0xff]
    %v1751 = vld [vmem:[#allocation4 + $0x1a0] sm:$0xff]
    %v1752 = vld [vmem:[#allocation4 + $0x1a8] sm:$0xff]
    %v1753 = vld [vmem:[#allocation4 + $0x1b0] sm:$0xff]
    %v1754 = vld [vmem:[#allocation4 + $0x1b8] sm:$0xff]
    %v1755 = vld [vmem:[#allocation4 + $0x1c0] sm:$0xff]
    %v1756 = vld [vmem:[#allocation4 + $0x1c8] sm:$0xff]
    %v1757 = vld [vmem:[#allocation4 + $0x1d0] sm:$0xff]
    %v1758 = vld [vmem:[#allocation4 + $0x1d8] sm:$0xff]
    %v1759 = vld [vmem:[#allocation4 + $0x1e0] sm:$0xff]
    %v1760 = vld [vmem:[#allocation4 + $0x1e8] sm:$0xff]
    %v1761 = vld [vmem:[#allocation4 + $0x1f0] sm:$0xff]
    %v1762 = vld [vmem:[#allocation4 + $0x1f8] sm:$0xff]
    %v1763 = vld [vmem:[#allocation4 + $0x200] sm:$0xff]
    %v1764 = vld [vmem:[#allocation4 + $0x208] sm:$0xff]
    %v1765 = vld [vmem:[#allocation4 + $0x210] sm:$0xff]
    %v1766 = vld [vmem:[#allocation4 + $0x218] sm:$0xff]
    %v1767 = vld [vmem:[#allocation4 + $0x220] sm:$0xff]
    %v1768 = vld [vmem:[#allocation4 + $0x228] sm:$0xff]
    %v1769 = vld [vmem:[#allocation4 + $0x230] sm:$0xff]
    %v1770 = vld [vmem:[#allocation4 + $0x238] sm:$0xff]
    %v1771 = vld [vmem:[#allocation4 + $0x240] sm:$0xff]
    %v1772 = vld [vmem:[#allocation4 + $0x248] sm:$0xff]
    %v1773 = vld [vmem:[#allocation4 + $0x250] sm:$0xff]
    %v1774 = vld [vmem:[#allocation4 + $0x258] sm:$0xff]
    %v1775 = vld [vmem:[#allocation4 + $0x260] sm:$0xff]
    %v1776 = vld [vmem:[#allocation4 + $0x268] sm:$0xff]
    %v1777 = vld [vmem:[#allocation4 + $0x270] sm:$0xff]
    %v1778 = vld [vmem:[#allocation4 + $0x278] sm:$0xff]
    %v1779 = vld [vmem:[#allocation4 + $0x280] sm:$0xff]
    %v1780 = vld [vmem:[#allocation4 + $0x288] sm:$0xff]
    %v1781 = vld [vmem:[#allocation4 + $0x290] sm:$0xff]
    %v1782 = vld [vmem:[#allocation4 + $0x298] sm:$0xff]
    %v1783 = vld [vmem:[#allocation4 + $0x2a0] sm:$0xff]
    %v1784 = vld [vmem:[#allocation4 + $0x2a8] sm:$0xff]
    %v1785 = vld [vmem:[#allocation4 + $0x2b0] sm:$0xff]
    %v1786 = vld [vmem:[#allocation4 + $0x2b8] sm:$0xff]
    %v1787 = vld [vmem:[#allocation4 + $0x2c0] sm:$0xff]
    %v1788 = vld [vmem:[#allocation4 + $0x2c8] sm:$0xff]
    %v1789 = vld [vmem:[#allocation4 + $0x2d0] sm:$0xff]
    %v1790 = vld [vmem:[#allocation4 + $0x2d8] sm:$0xff]
    %v1791 = vld [vmem:[#allocation4 + $0x2e0] sm:$0xff]
    %v1792 = vld [vmem:[#allocation4 + $0x2e8] sm:$0xff]
    %v1793 = vld [vmem:[#allocation4 + $0x2f0] sm:$0xff]
    %v1794 = vld [vmem:[#allocation4 + $0x2f8] sm:$0xff]
    %v1795 = vld [vmem:[#allocation4 + $0x300] sm:$0xff]
    %v1796 = vld [vmem:[#allocation4 + $0x308] sm:$0xff]
    %v1797 = vld [vmem:[#allocation4 + $0x310] sm:$0xff]
    %v1798 = vld [vmem:[#allocation4 + $0x318] sm:$0xff]
    %v1799 = vld [vmem:[#allocation4 + $0x320] sm:$0xff]
    %v1800 = vld [vmem:[#allocation4 + $0x328] sm:$0xff]
    %v1801 = vld [vmem:[#allocation4 + $0x330] sm:$0xff]
    %v1802 = vld [vmem:[#allocation4 + $0x338] sm:$0xff]
    %v1803 = vld [vmem:[#allocation4 + $0x340] sm:$0xff]
    %v1804 = vld [vmem:[#allocation4 + $0x348] sm:$0xff]
    %v1805 = vld [vmem:[#allocation4 + $0x350] sm:$0xff]
    %v1806 = vld [vmem:[#allocation4 + $0x358] sm:$0xff]
    %v1807 = vld [vmem:[#allocation4 + $0x360] sm:$0xff]
    %v1808 = vld [vmem:[#allocation4 + $0x368] sm:$0xff]
    %v1809 = vld [vmem:[#allocation4 + $0x370] sm:$0xff]
    %v1810 = vld [vmem:[#allocation4 + $0x378] sm:$0xff]
    %v1811 = vld [vmem:[#allocation4 + $0x380] sm:$0xff]
    %v1812 = vld [vmem:[#allocation4 + $0x388] sm:$0xff]
    %v1813 = vld [vmem:[#allocation4 + $0x390] sm:$0xff]
    %v1814 = vld [vmem:[#allocation4 + $0x398] sm:$0xff]
    %v1815 = vld [vmem:[#allocation4 + $0x3a0] sm:$0xff]
    %v1816 = vld [vmem:[#allocation4 + $0x3a8] sm:$0xff]
    %v1817 = vld [vmem:[#allocation4 + $0x3b0] sm:$0xff]
    %v1818 = vld [vmem:[#allocation4 + $0x3b8] sm:$0xff]
    %v1819 = vld [vmem:[#allocation4 + $0x3c0] sm:$0xff]
    %v1820 = vld [vmem:[#allocation4 + $0x3c8] sm:$0xff]
    %v1821 = vld [vmem:[#allocation4 + $0x3d0] sm:$0xff]
    %v1822 = vld [vmem:[#allocation4 + $0x3d8] sm:$0xff]
    %v1823 = vld [vmem:[#allocation4 + $0x3e0] sm:$0xff]
    %v1824 = vld [vmem:[#allocation4 + $0x3e8] sm:$0xff]
    %v1825 = vld [vmem:[#allocation4 + $0x3f0] sm:$0xff]
    %v1826 = vld [vmem:[#allocation4 + $0x3f8] sm:$0xff]
    %v1827 = vld [vmem:[%s6] sm:$0xf]
    %v1829 = vlaneseq
    %v1830 = vshrl.u32 %v1829, 7
    %v1831 = vsub.s32 0, %v1830
    %v1832 = vrot.slane %v1827, %v1831
    %v1833 = vlaneseq
    %v1834 = vshrl.u32 %v1833, 7
    %v1835 = vsub.s32 1, %v1834
    %v1836 = vrot.slane %v1827, %v1835
    %v1837 = vlaneseq
    %v1838 = vshrl.u32 %v1837, 7
    %v1839 = vsub.s32 2, %v1838
    %v1840 = vrot.slane %v1827, %v1839
    %v1841 = vlaneseq
    %v1842 = vshrl.u32 %v1841, 7
    %v1843 = vsub.s32 3, %v1842
    %v1844 = vrot.slane %v1827, %v1843
    %v1977 = vunpack.c.l.b16 %v1699
    %v1978 = vunpack.c.h.b16 %v1699
    %v1979 = vunpack.c.l.b16 %v1700
    %v1980 = vunpack.c.h.b16 %v1700
    %v1981 = vunpack.c.l.b16 %v1701
    %v1982 = vunpack.c.h.b16 %v1701
    %v1983 = vunpack.c.l.b16 %v1702
    %v1984 = vunpack.c.h.b16 %v1702
    %v1985 = vunpack.c.l.b16 %v1703
    %v1986 = vunpack.c.h.b16 %v1703
    %v1987 = vunpack.c.l.b16 %v1704
    %v1988 = vunpack.c.h.b16 %v1704
    %v1989 = vunpack.c.l.b16 %v1705
    %v1990 = vunpack.c.h.b16 %v1705
    %v1991 = vunpack.c.l.b16 %v1706
    %v1992 = vunpack.c.h.b16 %v1706
    %v1993 = vunpack.c.l.b16 %v1707
    %v1994 = vunpack.c.h.b16 %v1707
    %v1995 = vunpack.c.l.b16 %v1708
    %v1996 = vunpack.c.h.b16 %v1708
    %v1997 = vunpack.c.l.b16 %v1709
    %v1998 = vunpack.c.h.b16 %v1709
    %v1999 = vunpack.c.l.b16 %v1710
    %v2000 = vunpack.c.h.b16 %v1710
    %v2001 = vunpack.c.l.b16 %v1711
    %v2002 = vunpack.c.h.b16 %v1711
    %v2003 = vunpack.c.l.b16 %v1712
    %v2004 = vunpack.c.h.b16 %v1712
    %v2005 = vunpack.c.l.b16 %v1713
    %v2006 = vunpack.c.h.b16 %v1713
    %v2007 = vunpack.c.l.b16 %v1714
    %v2008 = vunpack.c.h.b16 %v1714
    %v2009 = vunpack.c.l.b16 %v1715
    %v2010 = vunpack.c.h.b16 %v1715
    %v2011 = vunpack.c.l.b16 %v1716
    %v2012 = vunpack.c.h.b16 %v1716
    %v2013 = vunpack.c.l.b16 %v1717
    %v2014 = vunpack.c.h.b16 %v1717
    %v2015 = vunpack.c.l.b16 %v1718
    %v2016 = vunpack.c.h.b16 %v1718
    %v2017 = vunpack.c.l.b16 %v1719
    %v2018 = vunpack.c.h.b16 %v1719
    %v2019 = vunpack.c.l.b16 %v1720
    %v2020 = vunpack.c.h.b16 %v1720
    %v2021 = vunpack.c.l.b16 %v1721
    %v2022 = vunpack.c.h.b16 %v1721
    %v2023 = vunpack.c.l.b16 %v1722
    %v2024 = vunpack.c.h.b16 %v1722
    %v2025 = vunpack.c.l.b16 %v1723
    %v2026 = vunpack.c.h.b16 %v1723
    %v2027 = vunpack.c.l.b16 %v1724
    %v2028 = vunpack.c.h.b16 %v1724
    %v2029 = vunpack.c.l.b16 %v1725
    %v2030 = vunpack.c.h.b16 %v1725
    %v2031 = vunpack.c.l.b16 %v1726
    %v2032 = vunpack.c.h.b16 %v1726
    %v2033 = vunpack.c.l.b16 %v1727
    %v2034 = vunpack.c.h.b16 %v1727
    %v2035 = vunpack.c.l.b16 %v1728
    %v2036 = vunpack.c.h.b16 %v1728
    %v2037 = vunpack.c.l.b16 %v1729
    %v2038 = vunpack.c.h.b16 %v1729
    %v2039 = vunpack.c.l.b16 %v1730
    %v2040 = vunpack.c.h.b16 %v1730
    %v2041 = vunpack.c.l.b16 %v1731
    %v2042 = vunpack.c.h.b16 %v1731
    %v2043 = vunpack.c.l.b16 %v1732
    %v2044 = vunpack.c.h.b16 %v1732
    %v2045 = vunpack.c.l.b16 %v1733
    %v2046 = vunpack.c.h.b16 %v1733
    %v2047 = vunpack.c.l.b16 %v1734
    %v2048 = vunpack.c.h.b16 %v1734
    %v2049 = vunpack.c.l.b16 %v1735
    %v2050 = vunpack.c.h.b16 %v1735
    %v2051 = vunpack.c.l.b16 %v1736
    %v2052 = vunpack.c.h.b16 %v1736
    %v2053 = vunpack.c.l.b16 %v1737
    %v2054 = vunpack.c.h.b16 %v1737
    %v2055 = vunpack.c.l.b16 %v1738
    %v2056 = vunpack.c.h.b16 %v1738
    %v2057 = vunpack.c.l.b16 %v1739
    %v2058 = vunpack.c.h.b16 %v1739
    %v2059 = vunpack.c.l.b16 %v1740
    %v2060 = vunpack.c.h.b16 %v1740
    %v2061 = vunpack.c.l.b16 %v1741
    %v2062 = vunpack.c.h.b16 %v1741
    %v2063 = vunpack.c.l.b16 %v1742
    %v2064 = vunpack.c.h.b16 %v1742
    %v2065 = vunpack.c.l.b16 %v1743
    %v2066 = vunpack.c.h.b16 %v1743
    %v2067 = vunpack.c.l.b16 %v1744
    %v2068 = vunpack.c.h.b16 %v1744
    %v2069 = vunpack.c.l.b16 %v1745
    %v2070 = vunpack.c.h.b16 %v1745
    %v2071 = vunpack.c.l.b16 %v1746
    %v2072 = vunpack.c.h.b16 %v1746
    %v2073 = vunpack.c.l.b16 %v1747
    %v2074 = vunpack.c.h.b16 %v1747
    %v2075 = vunpack.c.l.b16 %v1748
    %v2076 = vunpack.c.h.b16 %v1748
    %v2077 = vunpack.c.l.b16 %v1749
    %v2078 = vunpack.c.h.b16 %v1749
    %v2079 = vunpack.c.l.b16 %v1750
    %v2080 = vunpack.c.h.b16 %v1750
    %v2081 = vunpack.c.l.b16 %v1751
    %v2082 = vunpack.c.h.b16 %v1751
    %v2083 = vunpack.c.l.b16 %v1752
    %v2084 = vunpack.c.h.b16 %v1752
    %v2085 = vunpack.c.l.b16 %v1753
    %v2086 = vunpack.c.h.b16 %v1753
    %v2087 = vunpack.c.l.b16 %v1754
    %v2088 = vunpack.c.h.b16 %v1754
    %v2089 = vunpack.c.l.b16 %v1755
    %v2090 = vunpack.c.h.b16 %v1755
    %v2091 = vunpack.c.l.b16 %v1756
    %v2092 = vunpack.c.h.b16 %v1756
    %v2093 = vunpack.c.l.b16 %v1757
    %v2094 = vunpack.c.h.b16 %v1757
    %v2095 = vunpack.c.l.b16 %v1758
    %v2096 = vunpack.c.h.b16 %v1758
    %v2097 = vunpack.c.l.b16 %v1759
    %v2098 = vunpack.c.h.b16 %v1759
    %v2099 = vunpack.c.l.b16 %v1760
    %v2100 = vunpack.c.h.b16 %v1760
    %v2101 = vunpack.c.l.b16 %v1761
    %v2102 = vunpack.c.h.b16 %v1761
    %v2103 = vunpack.c.l.b16 %v1762
    %v2104 = vunpack.c.h.b16 %v1762
    %v2105 = vunpack.c.l.b16 %v1763
    %v2106 = vunpack.c.h.b16 %v1763
    %v2107 = vunpack.c.l.b16 %v1764
    %v2108 = vunpack.c.h.b16 %v1764
    %v2109 = vunpack.c.l.b16 %v1765
    %v2110 = vunpack.c.h.b16 %v1765
    %v2111 = vunpack.c.l.b16 %v1766
    %v2112 = vunpack.c.h.b16 %v1766
    %v2113 = vunpack.c.l.b16 %v1767
    %v2114 = vunpack.c.h.b16 %v1767
    %v2115 = vunpack.c.l.b16 %v1768
    %v2116 = vunpack.c.h.b16 %v1768
    %v2117 = vunpack.c.l.b16 %v1769
    %v2118 = vunpack.c.h.b16 %v1769
    %v2119 = vunpack.c.l.b16 %v1770
    %v2120 = vunpack.c.h.b16 %v1770
    %v2121 = vunpack.c.l.b16 %v1771
    %v2122 = vunpack.c.h.b16 %v1771
    %v2123 = vunpack.c.l.b16 %v1772
    %v2124 = vunpack.c.h.b16 %v1772
    %v2125 = vunpack.c.l.b16 %v1773
    %v2126 = vunpack.c.h.b16 %v1773
    %v2127 = vunpack.c.l.b16 %v1774
    %v2128 = vunpack.c.h.b16 %v1774
    %v2129 = vunpack.c.l.b16 %v1775
    %v2130 = vunpack.c.h.b16 %v1775
    %v2131 = vunpack.c.l.b16 %v1776
    %v2132 = vunpack.c.h.b16 %v1776
    %v2133 = vunpack.c.l.b16 %v1777
    %v2134 = vunpack.c.h.b16 %v1777
    %v2135 = vunpack.c.l.b16 %v1778
    %v2136 = vunpack.c.h.b16 %v1778
    %v2137 = vunpack.c.l.b16 %v1779
    %v2138 = vunpack.c.h.b16 %v1779
    %v2139 = vunpack.c.l.b16 %v1780
    %v2140 = vunpack.c.h.b16 %v1780
    %v2141 = vunpack.c.l.b16 %v1781
    %v2142 = vunpack.c.h.b16 %v1781
    %v2143 = vunpack.c.l.b16 %v1782
    %v2144 = vunpack.c.h.b16 %v1782
    %v2145 = vunpack.c.l.b16 %v1783
    %v2146 = vunpack.c.h.b16 %v1783
    %v2147 = vunpack.c.l.b16 %v1784
    %v2148 = vunpack.c.h.b16 %v1784
    %v2149 = vunpack.c.l.b16 %v1785
    %v2150 = vunpack.c.h.b16 %v1785
    %v2151 = vunpack.c.l.b16 %v1786
    %v2152 = vunpack.c.h.b16 %v1786
    %v2153 = vunpack.c.l.b16 %v1787
    %v2154 = vunpack.c.h.b16 %v1787
    %v2155 = vunpack.c.l.b16 %v1788
    %v2156 = vunpack.c.h.b16 %v1788
    %v2157 = vunpack.c.l.b16 %v1789
    %v2158 = vunpack.c.h.b16 %v1789
    %v2159 = vunpack.c.l.b16 %v1790
    %v2160 = vunpack.c.h.b16 %v1790
    %v2161 = vunpack.c.l.b16 %v1791
    %v2162 = vunpack.c.h.b16 %v1791
    %v2163 = vunpack.c.l.b16 %v1792
    %v2164 = vunpack.c.h.b16 %v1792
    %v2165 = vunpack.c.l.b16 %v1793
    %v2166 = vunpack.c.h.b16 %v1793
    %v2167 = vunpack.c.l.b16 %v1794
    %v2168 = vunpack.c.h.b16 %v1794
    %v2169 = vunpack.c.l.b16 %v1795
    %v2170 = vunpack.c.h.b16 %v1795
    %v2171 = vunpack.c.l.b16 %v1796
    %v2172 = vunpack.c.h.b16 %v1796
    %v2173 = vunpack.c.l.b16 %v1797
    %v2174 = vunpack.c.h.b16 %v1797
    %v2175 = vunpack.c.l.b16 %v1798
    %v2176 = vunpack.c.h.b16 %v1798
    %v2177 = vunpack.c.l.b16 %v1799
    %v2178 = vunpack.c.h.b16 %v1799
    %v2179 = vunpack.c.l.b16 %v1800
    %v2180 = vunpack.c.h.b16 %v1800
    %v2181 = vunpack.c.l.b16 %v1801
    %v2182 = vunpack.c.h.b16 %v1801
    %v2183 = vunpack.c.l.b16 %v1802
    %v2184 = vunpack.c.h.b16 %v1802
    %v2185 = vunpack.c.l.b16 %v1803
    %v2186 = vunpack.c.h.b16 %v1803
    %v2187 = vunpack.c.l.b16 %v1804
    %v2188 = vunpack.c.h.b16 %v1804
    %v2189 = vunpack.c.l.b16 %v1805
    %v2190 = vunpack.c.h.b16 %v1805
    %v2191 = vunpack.c.l.b16 %v1806
    %v2192 = vunpack.c.h.b16 %v1806
    %v2193 = vunpack.c.l.b16 %v1807
    %v2194 = vunpack.c.h.b16 %v1807
    %v2195 = vunpack.c.l.b16 %v1808
    %v2196 = vunpack.c.h.b16 %v1808
    %v2197 = vunpack.c.l.b16 %v1809
    %v2198 = vunpack.c.h.b16 %v1809
    %v2199 = vunpack.c.l.b16 %v1810
    %v2200 = vunpack.c.h.b16 %v1810
    %v2201 = vunpack.c.l.b16 %v1811
    %v2202 = vunpack.c.h.b16 %v1811
    %v2203 = vunpack.c.l.b16 %v1812
    %v2204 = vunpack.c.h.b16 %v1812
    %v2205 = vunpack.c.l.b16 %v1813
    %v2206 = vunpack.c.h.b16 %v1813
    %v2207 = vunpack.c.l.b16 %v1814
    %v2208 = vunpack.c.h.b16 %v1814
    %v2209 = vunpack.c.l.b16 %v1815
    %v2210 = vunpack.c.h.b16 %v1815
    %v2211 = vunpack.c.l.b16 %v1816
    %v2212 = vunpack.c.h.b16 %v1816
    %v2213 = vunpack.c.l.b16 %v1817
    %v2214 = vunpack.c.h.b16 %v1817
    %v2215 = vunpack.c.l.b16 %v1818
    %v2216 = vunpack.c.h.b16 %v1818
    %v2217 = vunpack.c.l.b16 %v1819
    %v2218 = vunpack.c.h.b16 %v1819
    %v2219 = vunpack.c.l.b16 %v1820
    %v2220 = vunpack.c.h.b16 %v1820
    %v2221 = vunpack.c.l.b16 %v1821
    %v2222 = vunpack.c.h.b16 %v1821
    %v2223 = vunpack.c.l.b16 %v1822
    %v2224 = vunpack.c.h.b16 %v1822
    %v2225 = vunpack.c.l.b16 %v1823
    %v2226 = vunpack.c.h.b16 %v1823
    %v2227 = vunpack.c.l.b16 %v1824
    %v2228 = vunpack.c.h.b16 %v1824
    %v2229 = vunpack.c.l.b16 %v1825
    %v2230 = vunpack.c.h.b16 %v1825
    %v2231 = vunpack.c.l.b16 %v1826
    %v2232 = vunpack.c.h.b16 %v1826
    %v2233 = vpack.c.b16 %v1981, %v1977
    %v2234 = vpack.c.b16 %v1982, %v1978
    %v2235 = vpack.c.b16 %v1983, %v1979
    %v2236 = vpack.c.b16 %v1984, %v1980
    %v2237 = vpack.c.b16 %v1989, %v1985
    %v2238 = vpack.c.b16 %v1990, %v1986
    %v2239 = vpack.c.b16 %v1991, %v1987
    %v2240 = vpack.c.b16 %v1992, %v1988
    %v2241 = vpack.c.b16 %v1997, %v1993
    %v2242 = vpack.c.b16 %v1998, %v1994
    %v2243 = vpack.c.b16 %v1999, %v1995
    %v2244 = vpack.c.b16 %v2000, %v1996
    %v2245 = vpack.c.b16 %v2005, %v2001
    %v2246 = vpack.c.b16 %v2006, %v2002
    %v2247 = vpack.c.b16 %v2007, %v2003
    %v2248 = vpack.c.b16 %v2008, %v2004
    %v2249 = vpack.c.b16 %v2013, %v2009
    %v2250 = vpack.c.b16 %v2014, %v2010
    %v2251 = vpack.c.b16 %v2015, %v2011
    %v2252 = vpack.c.b16 %v2016, %v2012
    %v2253 = vpack.c.b16 %v2021, %v2017
    %v2254 = vpack.c.b16 %v2022, %v2018
    %v2255 = vpack.c.b16 %v2023, %v2019
    %v2256 = vpack.c.b16 %v2024, %v2020
    %v2257 = vpack.c.b16 %v2029, %v2025
    %v2258 = vpack.c.b16 %v2030, %v2026
    %v2259 = vpack.c.b16 %v2031, %v2027
    %v2260 = vpack.c.b16 %v2032, %v2028
    %v2261 = vpack.c.b16 %v2037, %v2033
    %v2262 = vpack.c.b16 %v2038, %v2034
    %v2263 = vpack.c.b16 %v2039, %v2035
    %v2264 = vpack.c.b16 %v2040, %v2036
    %v2265 = vpack.c.b16 %v2045, %v2041
    %v2266 = vpack.c.b16 %v2046, %v2042
    %v2267 = vpack.c.b16 %v2047, %v2043
    %v2268 = vpack.c.b16 %v2048, %v2044
    %v2269 = vpack.c.b16 %v2053, %v2049
    %v2270 = vpack.c.b16 %v2054, %v2050
    %v2271 = vpack.c.b16 %v2055, %v2051
    %v2272 = vpack.c.b16 %v2056, %v2052
    %v2273 = vpack.c.b16 %v2061, %v2057
    %v2274 = vpack.c.b16 %v2062, %v2058
    %v2275 = vpack.c.b16 %v2063, %v2059
    %v2276 = vpack.c.b16 %v2064, %v2060
    %v2277 = vpack.c.b16 %v2069, %v2065
    %v2278 = vpack.c.b16 %v2070, %v2066
    %v2279 = vpack.c.b16 %v2071, %v2067
    %v2280 = vpack.c.b16 %v2072, %v2068
    %v2281 = vpack.c.b16 %v2077, %v2073
    %v2282 = vpack.c.b16 %v2078, %v2074
    %v2283 = vpack.c.b16 %v2079, %v2075
    %v2284 = vpack.c.b16 %v2080, %v2076
    %v2285 = vpack.c.b16 %v2085, %v2081
    %v2286 = vpack.c.b16 %v2086, %v2082
    %v2287 = vpack.c.b16 %v2087, %v2083
    %v2288 = vpack.c.b16 %v2088, %v2084
    %v2289 = vpack.c.b16 %v2093, %v2089
    %v2290 = vpack.c.b16 %v2094, %v2090
    %v2291 = vpack.c.b16 %v2095, %v2091
    %v2292 = vpack.c.b16 %v2096, %v2092
    %v2293 = vpack.c.b16 %v2101, %v2097
    %v2294 = vpack.c.b16 %v2102, %v2098
    %v2295 = vpack.c.b16 %v2103, %v2099
    %v2296 = vpack.c.b16 %v2104, %v2100
    %v2297 = vpack.c.b16 %v2109, %v2105
    %v2298 = vpack.c.b16 %v2110, %v2106
    %v2299 = vpack.c.b16 %v2111, %v2107
    %v2300 = vpack.c.b16 %v2112, %v2108
    %v2301 = vpack.c.b16 %v2117, %v2113
    %v2302 = vpack.c.b16 %v2118, %v2114
    %v2303 = vpack.c.b16 %v2119, %v2115
    %v2304 = vpack.c.b16 %v2120, %v2116
    %v2305 = vpack.c.b16 %v2125, %v2121
    %v2306 = vpack.c.b16 %v2126, %v2122
    %v2307 = vpack.c.b16 %v2127, %v2123
    %v2308 = vpack.c.b16 %v2128, %v2124
    %v2309 = vpack.c.b16 %v2133, %v2129
    %v2310 = vpack.c.b16 %v2134, %v2130
    %v2311 = vpack.c.b16 %v2135, %v2131
    %v2312 = vpack.c.b16 %v2136, %v2132
    %v2313 = vpack.c.b16 %v2141, %v2137
    %v2314 = vpack.c.b16 %v2142, %v2138
    %v2315 = vpack.c.b16 %v2143, %v2139
    %v2316 = vpack.c.b16 %v2144, %v2140
    %v2317 = vpack.c.b16 %v2149, %v2145
    %v2318 = vpack.c.b16 %v2150, %v2146
    %v2319 = vpack.c.b16 %v2151, %v2147
    %v2320 = vpack.c.b16 %v2152, %v2148
    %v2321 = vpack.c.b16 %v2157, %v2153
    %v2322 = vpack.c.b16 %v2158, %v2154
    %v2323 = vpack.c.b16 %v2159, %v2155
    %v2324 = vpack.c.b16 %v2160, %v2156
    %v2325 = vpack.c.b16 %v2165, %v2161
    %v2326 = vpack.c.b16 %v2166, %v2162
    %v2327 = vpack.c.b16 %v2167, %v2163
    %v2328 = vpack.c.b16 %v2168, %v2164
    %v2329 = vpack.c.b16 %v2173, %v2169
    %v2330 = vpack.c.b16 %v2174, %v2170
    %v2331 = vpack.c.b16 %v2175, %v2171
    %v2332 = vpack.c.b16 %v2176, %v2172
    %v2333 = vpack.c.b16 %v2181, %v2177
    %v2334 = vpack.c.b16 %v2182, %v2178
    %v2335 = vpack.c.b16 %v2183, %v2179
    %v2336 = vpack.c.b16 %v2184, %v2180
    %v2337 = vpack.c.b16 %v2189, %v2185
    %v2338 = vpack.c.b16 %v2190, %v2186
    %v2339 = vpack.c.b16 %v2191, %v2187
    %v2340 = vpack.c.b16 %v2192, %v2188
    %v2341 = vpack.c.b16 %v2197, %v2193
    %v2342 = vpack.c.b16 %v2198, %v2194
    %v2343 = vpack.c.b16 %v2199, %v2195
    %v2344 = vpack.c.b16 %v2200, %v2196
    %v2345 = vpack.c.b16 %v2205, %v2201
    %v2346 = vpack.c.b16 %v2206, %v2202
    %v2347 = vpack.c.b16 %v2207, %v2203
    %v2348 = vpack.c.b16 %v2208, %v2204
    %v2349 = vpack.c.b16 %v2213, %v2209
    %v2350 = vpack.c.b16 %v2214, %v2210
    %v2351 = vpack.c.b16 %v2215, %v2211
    %v2352 = vpack.c.b16 %v2216, %v2212
    %v2353 = vpack.c.b16 %v2221, %v2217
    %v2354 = vpack.c.b16 %v2222, %v2218
    %v2355 = vpack.c.b16 %v2223, %v2219
    %v2356 = vpack.c.b16 %v2224, %v2220
    %v2357 = vpack.c.b16 %v2229, %v2225
    %v2358 = vpack.c.b16 %v2230, %v2226
    %v2359 = vpack.c.b16 %v2231, %v2227
    %v2360 = vpack.c.b16 %v2232, %v2228
    %2489 = vmatprep.subr.bf16.mxu0 %v2234
    %2490 = vmatpush1.bf16.msra.mxu0 %v2233
    %2491 = vmatprep.subr.bf16.mxu0 %v2238
    %2492 = vmatpush1.bf16.msra.mxu0 %v2237
    %2493 = vmatprep.subr.bf16.mxu0 %v2242
    %2494 = vmatpush1.bf16.msra.mxu0 %v2241
    %2495 = vmatprep.subr.bf16.mxu0 %v2246
    %2496 = vmatpush1.bf16.msra.mxu0 %v2245
    %2497 = vmatprep.subr.bf16.mxu0 %v2250
    %2498 = vmatpush1.bf16.msra.mxu0 %v2249
    %2499 = vmatprep.subr.bf16.mxu0 %v2254
    %2500 = vmatpush1.bf16.msra.mxu0 %v2253
    %2501 = vmatprep.subr.bf16.mxu0 %v2258
    %2502 = vmatpush1.bf16.msra.mxu0 %v2257
    %2503 = vmatprep.subr.bf16.mxu0 %v2262
    %2504 = vmatpush1.bf16.msra.mxu0 %v2261
    %2505 = vmatprep.subr.bf16.mxu0 %v2266
    %2506 = vmatpush1.bf16.msra.mxu0 %v2265
    %2507 = vmatprep.subr.bf16.mxu0 %v2270
    %2508 = vmatpush1.bf16.msra.mxu0 %v2269
    %2509 = vmatprep.subr.bf16.mxu0 %v2274
    %2510 = vmatpush1.bf16.msra.mxu0 %v2273
    %2511 = vmatprep.subr.bf16.mxu0 %v2278
    %2512 = vmatpush1.bf16.msra.mxu0 %v2277
    %2513 = vmatprep.subr.bf16.mxu0 %v2282
    %2514 = vmatpush1.bf16.msra.mxu0 %v2281
    %2515 = vmatprep.subr.bf16.mxu0 %v2286
    %2516 = vmatpush1.bf16.msra.mxu0 %v2285
    %2517 = vmatprep.subr.bf16.mxu0 %v2290
    %2518 = vmatpush1.bf16.msra.mxu0 %v2289
    %2519 = vmatprep.subr.bf16.mxu0 %v2294
    %2520 = vmatpush1.bf16.msra.mxu0 %v2293
    %2521 = vmatprep.mubr.bf16.mxu0 %v1696
    %2522 = vmatmul.mubr.bf16.gmra.mrb[0].mxu0 %v1695
    %v2523 = vpop.f32.mrb[0].mxu0
    %v2524 = vadd.f32 %v1832, %v2523
    %v2525 = vpop.f32.mrb[0].mxu0
    %v2526 = vadd.f32 %v1836, %v2525
    %v2527 = vpop.f32.mrb[0].mxu0
    %v2528 = vpop.f32.mrb[0].mxu0
    %2529 = vdwg.mxu0
    %2530 = vmatprep.subr.bf16.mxu0 %v2298
    %2531 = vmatpush1.bf16.msra.mxu0 %v2297
    %2532 = vmatprep.subr.bf16.mxu0 %v2302
    %2533 = vmatpush1.bf16.msra.mxu0 %v2301
    %2534 = vmatprep.subr.bf16.mxu0 %v2306
    %2535 = vmatpush1.bf16.msra.mxu0 %v2305
    %2536 = vmatprep.subr.bf16.mxu0 %v2310
    %2537 = vmatpush1.bf16.msra.mxu0 %v2309
    %2538 = vmatprep.subr.bf16.mxu0 %v2314
    %2539 = vmatpush1.bf16.msra.mxu0 %v2313
    %2540 = vmatprep.subr.bf16.mxu0 %v2318
    %2541 = vmatpush1.bf16.msra.mxu0 %v2317
    %2542 = vmatprep.subr.bf16.mxu0 %v2322
    %2543 = vmatpush1.bf16.msra.mxu0 %v2321
    %2544 = vmatprep.subr.bf16.mxu0 %v2326
    %2545 = vmatpush1.bf16.msra.mxu0 %v2325
    %2546 = vmatprep.subr.bf16.mxu0 %v2330
    %2547 = vmatpush1.bf16.msra.mxu0 %v2329
    %2548 = vmatprep.subr.bf16.mxu0 %v2334
    %2549 = vmatpush1.bf16.msra.mxu0 %v2333
    %2550 = vmatprep.subr.bf16.mxu0 %v2338
    %2551 = vmatpush1.bf16.msra.mxu0 %v2337
    %2552 = vmatprep.subr.bf16.mxu0 %v2342
    %2553 = vmatpush1.bf16.msra.mxu0 %v2341
    %2554 = vmatprep.subr.bf16.mxu0 %v2346
    %2555 = vmatpush1.bf16.msra.mxu0 %v2345
    %2556 = vmatprep.subr.bf16.mxu0 %v2350
    %2557 = vmatpush1.bf16.msra.mxu0 %v2349
    %2558 = vmatprep.subr.bf16.mxu0 %v2354
    %2559 = vmatpush1.bf16.msra.mxu0 %v2353
    %2560 = vmatprep.subr.bf16.mxu0 %v2358
    %2561 = vmatpush1.bf16.msra.mxu0 %v2357
    %2562 = vmatprep.mubr.bf16.mxu0 %v1698
    %2563 = vmatmul.mubr.bf16.gmra.mrb[0].mxu0 %v1697
    %v2564 = vpop.f32.mrb[0].mxu0
    %v2565 = vadd.f32 %v2524, %v2564
    %v2566 = vpop.f32.mrb[0].mxu0
    %v2567 = vadd.f32 %v2526, %v2566
    %v2568 = vpop.f32.mrb[0].mxu0
    %v2569 = vpop.f32.mrb[0].mxu0
    %2570 = vdwg.mxu0
    %2571 = vmatprep.subr.bf16.mxu0 %v2236
    %2572 = vmatpush1.bf16.msra.mxu0 %v2235
    %2573 = vmatprep.subr.bf16.mxu0 %v2240
    %2574 = vmatpush1.bf16.msra.mxu0 %v2239
    %2575 = vmatprep.subr.bf16.mxu0 %v2244
    %2576 = vmatpush1.bf16.msra.mxu0 %v2243
    %2577 = vmatprep.subr.bf16.mxu0 %v2248
    %2578 = vmatpush1.bf16.msra.mxu0 %v2247
    %2579 = vmatprep.subr.bf16.mxu0 %v2252
    %2580 = vmatpush1.bf16.msra.mxu0 %v2251
    %2581 = vmatprep.subr.bf16.mxu0 %v2256
    %2582 = vmatpush1.bf16.msra.mxu0 %v2255
    %2583 = vmatprep.subr.bf16.mxu0 %v2260
    %2584 = vmatpush1.bf16.msra.mxu0 %v2259
    %2585 = vmatprep.subr.bf16.mxu0 %v2264
    %2586 = vmatpush1.bf16.msra.mxu0 %v2263
    %2587 = vmatprep.subr.bf16.mxu0 %v2268
    %2588 = vmatpush1.bf16.msra.mxu0 %v2267
    %2589 = vmatprep.subr.bf16.mxu0 %v2272
    %2590 = vmatpush1.bf16.msra.mxu0 %v2271
    %2591 = vmatprep.subr.bf16.mxu0 %v2276
    %2592 = vmatpush1.bf16.msra.mxu0 %v2275
    %2593 = vmatprep.subr.bf16.mxu0 %v2280
    %2594 = vmatpush1.bf16.msra.mxu0 %v2279
    %2595 = vmatprep.subr.bf16.mxu0 %v2284
    %2596 = vmatpush1.bf16.msra.mxu0 %v2283
    %2597 = vmatprep.subr.bf16.mxu0 %v2288
    %2598 = vmatpush1.bf16.msra.mxu0 %v2287
    %2599 = vmatprep.subr.bf16.mxu0 %v2292
    %2600 = vmatpush1.bf16.msra.mxu0 %v2291
    %2601 = vmatprep.subr.bf16.mxu0 %v2296
    %2602 = vmatpush1.bf16.msra.mxu0 %v2295
    %2603 = vmatprep.mubr.bf16.mxu0 %v1696
    %2604 = vmatmul.mubr.bf16.gmra.mrb[0].mxu0 %v1695
    %v2605 = vpop.f32.mrb[0].mxu0
    %v2606 = vadd.f32 %v1840, %v2605
    %v2607 = vpop.f32.mrb[0].mxu0
    %v2608 = vadd.f32 %v1844, %v2607
    %v2609 = vpop.f32.mrb[0].mxu0
    %v2610 = vpop.f32.mrb[0].mxu0
    %2611 = vdwg.mxu0
    %2612 = vmatprep.subr.bf16.mxu0 %v2300
    %2613 = vmatpush1.bf16.msra.mxu0 %v2299
    %2614 = vmatprep.subr.bf16.mxu0 %v2304
    %2615 = vmatpush1.bf16.msra.mxu0 %v2303
    %2616 = vmatprep.subr.bf16.mxu0 %v2308
    %2617 = vmatpush1.bf16.msra.mxu0 %v2307
    %2618 = vmatprep.subr.bf16.mxu0 %v2312
    %2619 = vmatpush1.bf16.msra.mxu0 %v2311
    %2620 = vmatprep.subr.bf16.mxu0 %v2316
    %2621 = vmatpush1.bf16.msra.mxu0 %v2315
    %2622 = vmatprep.subr.bf16.mxu0 %v2320
    %2623 = vmatpush1.bf16.msra.mxu0 %v2319
    %2624 = vmatprep.subr.bf16.mxu0 %v2324
    %2625 = vmatpush1.bf16.msra.mxu0 %v2323
    %2626 = vmatprep.subr.bf16.mxu0 %v2328
    %2627 = vmatpush1.bf16.msra.mxu0 %v2327
    %2628 = vmatprep.subr.bf16.mxu0 %v2332
    %2629 = vmatpush1.bf16.msra.mxu0 %v2331
    %2630 = vmatprep.subr.bf16.mxu0 %v2336
    %2631 = vmatpush1.bf16.msra.mxu0 %v2335
    %2632 = vmatprep.subr.bf16.mxu0 %v2340
    %2633 = vmatpush1.bf16.msra.mxu0 %v2339
    %2634 = vmatprep.subr.bf16.mxu0 %v2344
    %2635 = vmatpush1.bf16.msra.mxu0 %v2343
    %2636 = vmatprep.subr.bf16.mxu0 %v2348
    %2637 = vmatpush1.bf16.msra.mxu0 %v2347
    %2638 = vmatprep.subr.bf16.mxu0 %v2352
    %2639 = vmatpush1.bf16.msra.mxu0 %v2351
    %2640 = vmatprep.subr.bf16.mxu0 %v2356
    %2641 = vmatpush1.bf16.msra.mxu0 %v2355
    %2642 = vmatprep.subr.bf16.mxu0 %v2360
    %2643 = vmatpush1.bf16.msra.mxu0 %v2359
    %2644 = vmatprep.mubr.bf16.mxu0 %v1698
    %2645 = vmatmul.mubr.bf16.gmra.mrb[0].mxu0 %v1697
    %v2646 = vpop.f32.mrb[0].mxu0
    %v2647 = vadd.f32 %v2606, %v2646
    %v2648 = vpop.f32.mrb[0].mxu0
    %v2649 = vadd.f32 %v2608, %v2648
    %v2650 = vpop.f32.mrb[0].mxu0
    %v2651 = vpop.f32.mrb[0].mxu0
    %2652 = vdwg.mxu0
    %v2653 = vadd.f32 %v2565, %v2567
    %v2654 = vadd.f32 %v2653, %v2647
    %v2655 = vadd.f32 %v2654, %v2649
    %2656 = vadd.xlane.f32.xlu0 %v2655
    %v2657 = vpop.xlane.xlu0 %2656
    %v2658 = vmul.f32 %v2657, 0.001953125
    %v2659 = vmul.f32 %v2565, %v2565
    %v2660 = vmul.f32 %v2567, %v2567
    %v2661 = vmul.f32 %v2647, %v2647
    %v2662 = vmul.f32 %v2649, %v2649
    %v2663 = vadd.f32 %v2659, %v2660
    %v2664 = vadd.f32 %v2663, %v2661
    %v2665 = vadd.f32 %v2664, %v2662
    %2666 = vadd.xlane.f32.xlu0 %v2665
    %v2667 = vpop.xlane.xlu0 %2666
    %v2668 = vmul.f32 %v2667, 0.001953125
    %v2669 = vmul.f32 %v2658, %v2658
    %v2670 = vsub.f32 %v2668, %v2669
    %v2671 = vadd.f32 %v2670, 1e-05
    %v2672 = vrsqrt.pop %v2671
    %v2673 = vsub.f32 %v2565, %v2658
    %v2674 = vsub.f32 %v2567, %v2658
    %v2675 = vsub.f32 %v2647, %v2658
    %v2676 = vsub.f32 %v2649, %v2658
    %v2677 = vmul.f32 %v2673, %v2672
    %v2678 = vmul.f32 %v2674, %v2672
    %v2679 = vmul.f32 %v2675, %v2672
    %v2680 = vmul.f32 %v2676, %v2672
    %v2681 = vld [vmem:[%s7] sm:$0xf]
    %v2683 = vlaneseq
    %v2684 = vshrl.u32 %v2683, 7
    %v2685 = vsub.s32 0, %v2684
    %v2686 = vrot.slane %v2681, %v2685
    %v2687 = vlaneseq
    %v2688 = vshrl.u32 %v2687, 7
    %v2689 = vsub.s32 1, %v2688
    %v2690 = vrot.slane %v2681, %v2689
    %v2691 = vlaneseq
    %v2692 = vshrl.u32 %v2691, 7
    %v2693 = vsub.s32 2, %v2692
    %v2694 = vrot.slane %v2681, %v2693
    %v2695 = vlaneseq
    %v2696 = vshrl.u32 %v2695, 7
    %v2697 = vsub.s32 3, %v2696
    %v2698 = vrot.slane %v2681, %v2697
    %v2703 = vmul.f32 %v2677, %v2686
    %v2704 = vmul.f32 %v2678, %v2690
    %v2705 = vmul.f32 %v2679, %v2694
    %v2706 = vmul.f32 %v2680, %v2698
    %v2707 = vld [vmem:[%s8] sm:$0xf]
    %v2709 = vlaneseq
    %v2710 = vshrl.u32 %v2709, 7
    %v2711 = vsub.s32 0, %v2710
    %v2712 = vrot.slane %v2707, %v2711
    %v2713 = vlaneseq
    %v2714 = vshrl.u32 %v2713, 7
    %v2715 = vsub.s32 1, %v2714
    %v2716 = vrot.slane %v2707, %v2715
    %v2717 = vlaneseq
    %v2718 = vshrl.u32 %v2717, 7
    %v2719 = vsub.s32 2, %v2718
    %v2720 = vrot.slane %v2707, %v2719
    %v2721 = vlaneseq
    %v2722 = vshrl.u32 %v2721, 7
    %v2723 = vsub.s32 3, %v2722
    %v2724 = vrot.slane %v2707, %v2723
    %v2729 = vadd.f32 %v2703, %v2712
    %v2730 = vadd.f32 %v2704, %v2716
    %v2731 = vadd.f32 %v2705, %v2720
    %v2732 = vadd.f32 %v2706, %v2724
    %v2733 = vmax.f32 %v2729, 0.0
    %v2734 = vmax.f32 %v2730, 0.0
    %v2735 = vmax.f32 %v2731, 0.0
    %v2736 = vmax.f32 %v2732, 0.0
    %v2737 = vpack.c.bf16 %v2733, %v2733
    %v2738 = vpack.c.bf16 %v2734, %v2734
    %v2739 = vpack.c.bf16 %v2735, %v2735
    %v2740 = vpack.c.bf16 %v2736, %v2736
    %v2741 = vld [vmem:[%s9] sm:$0xf]
    %v2742 = vld [vmem:[%s9 + $0x4] sm:$0xf]
    %v2743 = vld [vmem:[%s9 + $0x8] sm:$0xf]
    %v2744 = vld [vmem:[%s9 + $0xc] sm:$0xf]
    %v2745 = vld [vmem:[%s9 + $0x10] sm:$0xf]
    %v2746 = vld [vmem:[%s9 + $0x14] sm:$0xf]
    %v2747 = vld [vmem:[%s9 + $0x18] sm:$0xf]
    %v2748 = vld [vmem:[%s9 + $0x1c] sm:$0xf]
    %v2749 = vld [vmem:[%s9 + $0x20] sm:$0xf]
    %v2750 = vld [vmem:[%s9 + $0x24] sm:$0xf]
    %v2751 = vld [vmem:[%s9 + $0x28] sm:$0xf]
    %v2752 = vld [vmem:[%s9 + $0x2c] sm:$0xf]
    %v2753 = vld [vmem:[%s9 + $0x30] sm:$0xf]
    %v2754 = vld [vmem:[%s9 + $0x34] sm:$0xf]
    %v2755 = vld [vmem:[%s9 + $0x38] sm:$0xf]
    %v2756 = vld [vmem:[%s9 + $0x3c] sm:$0xf]
    %v2757 = vld [vmem:[%s9 + $0x40] sm:$0xf]
    %v2758 = vld [vmem:[%s9 + $0x44] sm:$0xf]
    %v2759 = vld [vmem:[%s9 + $0x48] sm:$0xf]
    %v2760 = vld [vmem:[%s9 + $0x4c] sm:$0xf]
    %v2761 = vld [vmem:[%s9 + $0x50] sm:$0xf]
    %v2762 = vld [vmem:[%s9 + $0x54] sm:$0xf]
    %v2763 = vld [vmem:[%s9 + $0x58] sm:$0xf]
    %v2764 = vld [vmem:[%s9 + $0x5c] sm:$0xf]
    %v2765 = vld [vmem:[%s9 + $0x60] sm:$0xf]
    %v2766 = vld [vmem:[%s9 + $0x64] sm:$0xf]
    %v2767 = vld [vmem:[%s9 + $0x68] sm:$0xf]
    %v2768 = vld [vmem:[%s9 + $0x6c] sm:$0xf]
    %v2769 = vld [vmem:[%s9 + $0x70] sm:$0xf]
    %v2770 = vld [vmem:[%s9 + $0x74] sm:$0xf]
    %v2771 = vld [vmem:[%s9 + $0x78] sm:$0xf]
    %v2772 = vld [vmem:[%s9 + $0x7c] sm:$0xf]
    %v2773 = vld [vmem:[%s9 + $0x80] sm:$0xf]
    %v2774 = vld [vmem:[%s9 + $0x84] sm:$0xf]
    %v2775 = vld [vmem:[%s9 + $0x88] sm:$0xf]
    %v2776 = vld [vmem:[%s9 + $0x8c] sm:$0xf]
    %v2777 = vld [vmem:[%s9 + $0x90] sm:$0xf]
    %v2778 = vld [vmem:[%s9 + $0x94] sm:$0xf]
    %v2779 = vld [vmem:[%s9 + $0x98] sm:$0xf]
    %v2780 = vld [vmem:[%s9 + $0x9c] sm:$0xf]
    %v2781 = vld [vmem:[%s9 + $0xa0] sm:$0xf]
    %v2782 = vld [vmem:[%s9 + $0xa4] sm:$0xf]
    %v2783 = vld [vmem:[%s9 + $0xa8] sm:$0xf]
    %v2784 = vld [vmem:[%s9 + $0xac] sm:$0xf]
    %v2785 = vld [vmem:[%s9 + $0xb0] sm:$0xf]
    %v2786 = vld [vmem:[%s9 + $0xb4] sm:$0xf]
    %v2787 = vld [vmem:[%s9 + $0xb8] sm:$0xf]
    %v2788 = vld [vmem:[%s9 + $0xbc] sm:$0xf]
    %v2789 = vld [vmem:[%s9 + $0xc0] sm:$0xf]
    %v2790 = vld [vmem:[%s9 + $0xc4] sm:$0xf]
    %v2791 = vld [vmem:[%s9 + $0xc8] sm:$0xf]
    %v2792 = vld [vmem:[%s9 + $0xcc] sm:$0xf]
    %v2793 = vld [vmem:[%s9 + $0xd0] sm:$0xf]
    %v2794 = vld [vmem:[%s9 + $0xd4] sm:$0xf]
    %v2795 = vld [vmem:[%s9 + $0xd8] sm:$0xf]
    %v2796 = vld [vmem:[%s9 + $0xdc] sm:$0xf]
    %v2797 = vld [vmem:[%s9 + $0xe0] sm:$0xf]
    %v2798 = vld [vmem:[%s9 + $0xe4] sm:$0xf]
    %v2799 = vld [vmem:[%s9 + $0xe8] sm:$0xf]
    %v2800 = vld [vmem:[%s9 + $0xec] sm:$0xf]
    %v2801 = vld [vmem:[%s9 + $0xf0] sm:$0xf]
    %v2802 = vld [vmem:[%s9 + $0xf4] sm:$0xf]
    %v2803 = vld [vmem:[%s9 + $0xf8] sm:$0xf]
    %v2804 = vld [vmem:[%s9 + $0xfc] sm:$0xf]
    %v2805 = vld [vmem:[%s10] sm:$0x1]
    %v2807 = vlaneseq
    %v2808 = vshrl.u32 %v2807, 7
    %v2809 = vsub.s32 0, %v2808
    %v2810 = vrot.slane %v2805, %v2809
    %v2876 = vunpack.c.l.b16 %v2741
    %v2877 = vunpack.c.l.b16 %v2742
    %v2878 = vunpack.c.l.b16 %v2743
    %v2879 = vunpack.c.l.b16 %v2744
    %v2880 = vunpack.c.l.b16 %v2745
    %v2881 = vunpack.c.l.b16 %v2746
    %v2882 = vunpack.c.l.b16 %v2747
    %v2883 = vunpack.c.l.b16 %v2748
    %v2884 = vunpack.c.l.b16 %v2749
    %v2885 = vunpack.c.l.b16 %v2750
    %v2886 = vunpack.c.l.b16 %v2751
    %v2887 = vunpack.c.l.b16 %v2752
    %v2888 = vunpack.c.l.b16 %v2753
    %v2889 = vunpack.c.l.b16 %v2754
    %v2890 = vunpack.c.l.b16 %v2755
    %v2891 = vunpack.c.l.b16 %v2756
    %v2892 = vunpack.c.l.b16 %v2757
    %v2893 = vunpack.c.l.b16 %v2758
    %v2894 = vunpack.c.l.b16 %v2759
    %v2895 = vunpack.c.l.b16 %v2760
    %v2896 = vunpack.c.l.b16 %v2761
    %v2897 = vunpack.c.l.b16 %v2762
    %v2898 = vunpack.c.l.b16 %v2763
    %v2899 = vunpack.c.l.b16 %v2764
    %v2900 = vunpack.c.l.b16 %v2765
    %v2901 = vunpack.c.l.b16 %v2766
    %v2902 = vunpack.c.l.b16 %v2767
    %v2903 = vunpack.c.l.b16 %v2768
    %v2904 = vunpack.c.l.b16 %v2769
    %v2905 = vunpack.c.l.b16 %v2770
    %v2906 = vunpack.c.l.b16 %v2771
    %v2907 = vunpack.c.l.b16 %v2772
    %v2908 = vunpack.c.l.b16 %v2773
    %v2909 = vunpack.c.l.b16 %v2774
    %v2910 = vunpack.c.l.b16 %v2775
    %v2911 = vunpack.c.l.b16 %v2776
    %v2912 = vunpack.c.l.b16 %v2777
    %v2913 = vunpack.c.l.b16 %v2778
    %v2914 = vunpack.c.l.b16 %v2779
    %v2915 = vunpack.c.l.b16 %v2780
    %v2916 = vunpack.c.l.b16 %v2781
    %v2917 = vunpack.c.l.b16 %v2782
    %v2918 = vunpack.c.l.b16 %v2783
    %v2919 = vunpack.c.l.b16 %v2784
    %v2920 = vunpack.c.l.b16 %v2785
    %v2921 = vunpack.c.l.b16 %v2786
    %v2922 = vunpack.c.l.b16 %v2787
    %v2923 = vunpack.c.l.b16 %v2788
    %v2924 = vunpack.c.l.b16 %v2789
    %v2925 = vunpack.c.l.b16 %v2790
    %v2926 = vunpack.c.l.b16 %v2791
    %v2927 = vunpack.c.l.b16 %v2792
    %v2928 = vunpack.c.l.b16 %v2793
    %v2929 = vunpack.c.l.b16 %v2794
    %v2930 = vunpack.c.l.b16 %v2795
    %v2931 = vunpack.c.l.b16 %v2796
    %v2932 = vunpack.c.l.b16 %v2797
    %v2933 = vunpack.c.l.b16 %v2798
    %v2934 = vunpack.c.l.b16 %v2799
    %v2935 = vunpack.c.l.b16 %v2800
    %v2936 = vunpack.c.l.b16 %v2801
    %v2937 = vunpack.c.l.b16 %v2802
    %v2938 = vunpack.c.l.b16 %v2803
    %v2939 = vunpack.c.l.b16 %v2804
    %v2940 = vpack.c.b16 %v2877, %v2876
    %v2941 = vpack.c.b16 %v2879, %v2878
    %v2942 = vpack.c.b16 %v2881, %v2880
    %v2943 = vpack.c.b16 %v2883, %v2882
    %v2944 = vpack.c.b16 %v2885, %v2884
    %v2945 = vpack.c.b16 %v2887, %v2886
    %v2946 = vpack.c.b16 %v2889, %v2888
    %v2947 = vpack.c.b16 %v2891, %v2890
    %v2948 = vpack.c.b16 %v2893, %v2892
    %v2949 = vpack.c.b16 %v2895, %v2894
    %v2950 = vpack.c.b16 %v2897, %v2896
    %v2951 = vpack.c.b16 %v2899, %v2898
    %v2952 = vpack.c.b16 %v2901, %v2900
    %v2953 = vpack.c.b16 %v2903, %v2902
    %v2954 = vpack.c.b16 %v2905, %v2904
    %v2955 = vpack.c.b16 %v2907, %v2906
    %v2956 = vpack.c.b16 %v2909, %v2908
    %v2957 = vpack.c.b16 %v2911, %v2910
    %v2958 = vpack.c.b16 %v2913, %v2912
    %v2959 = vpack.c.b16 %v2915, %v2914
    %v2960 = vpack.c.b16 %v2917, %v2916
    %v2961 = vpack.c.b16 %v2919, %v2918
    %v2962 = vpack.c.b16 %v2921, %v2920
    %v2963 = vpack.c.b16 %v2923, %v2922
    %v2964 = vpack.c.b16 %v2925, %v2924
    %v2965 = vpack.c.b16 %v2927, %v2926
    %v2966 = vpack.c.b16 %v2929, %v2928
    %v2967 = vpack.c.b16 %v2931, %v2930
    %v2968 = vpack.c.b16 %v2933, %v2932
    %v2969 = vpack.c.b16 %v2935, %v2934
    %v2970 = vpack.c.b16 %v2937, %v2936
    %v2971 = vpack.c.b16 %v2939, %v2938
    %3004 = vmatprep.subr.bf16.mxu0 0
    %3005 = vmatpush1.bf16.msra.mxu0 %v2940
    %3006 = vmatprep.subr.bf16.mxu0 0
    %3007 = vmatpush1.bf16.msra.mxu0 %v2941
    %3008 = vmatprep.subr.bf16.mxu0 0
    %3009 = vmatpush1.bf16.msra.mxu0 %v2942
    %3010 = vmatprep.subr.bf16.mxu0 0
    %3011 = vmatpush1.bf16.msra.mxu0 %v2943
    %3012 = vmatprep.subr.bf16.mxu0 0
    %3013 = vmatpush1.bf16.msra.mxu0 %v2944
    %3014 = vmatprep.subr.bf16.mxu0 0
    %3015 = vmatpush1.bf16.msra.mxu0 %v2945
    %3016 = vmatprep.subr.bf16.mxu0 0
    %3017 = vmatpush1.bf16.msra.mxu0 %v2946
    %3018 = vmatprep.subr.bf16.mxu0 0
    %3019 = vmatpush1.bf16.msra.mxu0 %v2947
    %3020 = vmatprep.subr.bf16.mxu0 0
    %3021 = vmatpush1.bf16.msra.mxu0 %v2948
    %3022 = vmatprep.subr.bf16.mxu0 0
    %3023 = vmatpush1.bf16.msra.mxu0 %v2949
    %3024 = vmatprep.subr.bf16.mxu0 0
    %3025 = vmatpush1.bf16.msra.mxu0 %v2950
    %3026 = vmatprep.subr.bf16.mxu0 0
    %3027 = vmatpush1.bf16.msra.mxu0 %v2951
    %3028 = vmatprep.subr.bf16.mxu0 0
    %3029 = vmatpush1.bf16.msra.mxu0 %v2952
    %3030 = vmatprep.subr.bf16.mxu0 0
    %3031 = vmatpush1.bf16.msra.mxu0 %v2953
    %3032 = vmatprep.subr.bf16.mxu0 0
    %3033 = vmatpush1.bf16.msra.mxu0 %v2954
    %3034 = vmatprep.subr.bf16.mxu0 0
    %3035 = vmatpush1.bf16.msra.mxu0 %v2955
    %3036 = vmatprep.mubr.bf16.mxu0 %v2738
    %3037 = vmatmul.mubr.bf16.gmra.mrb[0].mxu0 %v2737
    %v3038 = vpop.f32.mrb[0].mxu0
    %v3039 = vadd.f32 %v2810, %v3038
    %v3040 = vpop.f32.mrb[0].mxu0
    %v3041 = vpop.f32.mrb[0].mxu0
    %v3042 = vpop.f32.mrb[0].mxu0
    %3043 = vdwg.mxu0
    %3044 = vmatprep.subr.bf16.mxu0 0
    %3045 = vmatpush1.bf16.msra.mxu0 %v2956
    %3046 = vmatprep.subr.bf16.mxu0 0
    %3047 = vmatpush1.bf16.msra.mxu0 %v2957
    %3048 = vmatprep.subr.bf16.mxu0 0
    %3049 = vmatpush1.bf16.msra.mxu0 %v2958
    %3050 = vmatprep.subr.bf16.mxu0 0
    %3051 = vmatpush1.bf16.msra.mxu0 %v2959
    %3052 = vmatprep.subr.bf16.mxu0 0
    %3053 = vmatpush1.bf16.msra.mxu0 %v2960
    %3054 = vmatprep.subr.bf16.mxu0 0
    %3055 = vmatpush1.bf16.msra.mxu0 %v2961
    %3056 = vmatprep.subr.bf16.mxu0 0
    %3057 = vmatpush1.bf16.msra.mxu0 %v2962
    %3058 = vmatprep.subr.bf16.mxu0 0
    %3059 = vmatpush1.bf16.msra.mxu0 %v2963
    %3060 = vmatprep.subr.bf16.mxu0 0
    %3061 = vmatpush1.bf16.msra.mxu0 %v2964
    %3062 = vmatprep.subr.bf16.mxu0 0
    %3063 = vmatpush1.bf16.msra.mxu0 %v2965
    %3064 = vmatprep.subr.bf16.mxu0 0
    %3065 = vmatpush1.bf16.msra.mxu0 %v2966
    %3066 = vmatprep.subr.bf16.mxu0 0
    %3067 = vmatpush1.bf16.msra.mxu0 %v2967
    %3068 = vmatprep.subr.bf16.mxu0 0
    %3069 = vmatpush1.bf16.msra.mxu0 %v2968
    %3070 = vmatprep.subr.bf16.mxu0 0
    %3071 = vmatpush1.bf16.msra.mxu0 %v2969
    %3072 = vmatprep.subr.bf16.mxu0 0
    %3073 = vmatpush1.bf16.msra.mxu0 %v2970
    %3074 = vmatprep.subr.bf16.mxu0 0
    %3075 = vmatpush1.bf16.msra.mxu0 %v2971
    %3076 = vmatprep.mubr.bf16.mxu0 %v2740
    %3077 = vmatmul.mubr.bf16.gmra.mrb[0].mxu0 %v2739
    %v3078 = vpop.f32.mrb[0].mxu0
    %v3079 = vadd.f32 %v3039, %v3078
    %v3080 = vpop.f32.mrb[0].mxu0
    %v3081 = vpop.f32.mrb[0].mxu0
    %v3082 = vpop.f32.mrb[0].mxu0
    %3083 = vdwg.mxu0
    %v3084 = vpack.c.bf16 %v3079, %v3079
    %3085 = vst [vmem:[%s11] sm:$0xf] %v3084
    // Predicated region
    $region54: #{ln_fmnist_mlp_forward.1} parent=1 // pred_check
      _
    $region55: #{ln_fmnist_mlp_forward.1} parent=1 // pred_check_branch
      %3087 = sbr.rel (0) target = $region57
    $region56: #{ln_fmnist_mlp_forward.1} parent=1 // pred_region
      _
    $region57: #{ln_fmnist_mlp_forward.1} parent=1 // pred_fallthru
      _
    // Predicated region
    $region58: #{ln_fmnist_mlp_forward.1} parent=1 // pred_check
      _
    $region59: #{ln_fmnist_mlp_forward.1} parent=1 // pred_check_branch
      %3089 = sbr.rel (0) target = $region61
    $region60: #{ln_fmnist_mlp_forward.1} parent=1 // pred_region
      _
    $region61: #{ln_fmnist_mlp_forward.1} parent=1 // pred_fallthru
      _
    %3090 = vsyncpa [#allocation3], 1
    %3091 = vsyncpa [#allocation5], 1

</llo_original>
